<compile_context>
chip_gen: v5e
topology: v5e:2x2
jax: 0.10.0
libtpu: 0.0.40
codegen_flags: <defaults>
</compile_context>

<pallas_src>
import math
import functools

import jax
import jax.numpy as jnp
from jax.experimental import pallas as pl
from jax.experimental.pallas import tpu as pltpu


def _pick_tile(s, target):
    """Largest multiple-of-8 divisor of s that is <= target (else s itself)."""
    if s <= target:
        return s
    for t in range(target, 7, -8):
        if s % t == 0:
            return t
    return s


# --------------------------------------------------------------------------
# Kernel 1: per-head QKV projection of kw.  grid = (B, H, S-tiles)
# --------------------------------------------------------------------------
def _qkv_proj_kernel(kw_ref, w_ref, q_ref, k_ref, v_ref):
    # kw_ref: (1, ts, D)   w_ref: (3, 1, D, dh)   q/k/v_ref: (1, 1, ts, dh)
    f32 = jnp.float32
    kw = kw_ref[0]                                               # (ts, D)
    q_ref[0, 0] = jnp.dot(kw, w_ref[0, 0], preferred_element_type=f32).astype(q_ref.dtype)
    k_ref[0, 0] = jnp.dot(kw, w_ref[1, 0], preferred_element_type=f32).astype(k_ref.dtype)
    v_ref[0, 0] = jnp.dot(kw, w_ref[2, 0], preferred_element_type=f32).astype(v_ref.dtype)


# --------------------------------------------------------------------------
# Kernel 2: per-head flash attention.  grid = (B, H, q-tiles, kv-tiles)
# --------------------------------------------------------------------------
def _flash_attn_kernel(q_ref, k_ref, v_ref, o_ref, m_sc, l_sc, acc_sc, *, causal):
    # q_ref: (1,1,tq,dh)  k/v_ref: (1,1,tk,dh)  o_ref: (1,1,tq,dh)
    # scratch: m/l (tq,1) f32, acc (tq,dh) f32
    f32 = jnp.float32
    tq = q_ref.shape[2]
    tk = k_ref.shape[2]
    qi = pl.program_id(2)
    ki = pl.program_id(3)
    nk = pl.num_programs(3)

    @pl.when(ki == 0)
    def _():
        m_sc[...] = jnp.full_like(m_sc, -1e30)
        l_sc[...] = jnp.zeros_like(l_sc)
        acc_sc[...] = jnp.zeros_like(acc_sc)

    def _attend():
        q = q_ref[0, 0]                                          # (tq, dh), pre-scaled
        k = k_ref[0, 0]                                          # (tk, dh)
        # contract dh of both -> (tq, tk); no transpose needed
        s = jax.lax.dot_general(q, k, (((1,), (1,)), ((), ())),
                                preferred_element_type=f32)
        if causal:
            qpos = qi * tq + jax.lax.broadcasted_iota(jnp.int32, (tq, tk), 0)
            kpos = ki * tk + jax.lax.broadcasted_iota(jnp.int32, (tq, tk), 1)
            s = jnp.where(kpos > qpos, -1e30, s)                 # finite, NaN-safe
        m_prev = m_sc[...]
        m_new = jnp.maximum(m_prev, jnp.max(s, axis=-1, keepdims=True))
        alpha = jnp.exp(m_prev - m_new)
        p = jnp.exp(s - m_new)
        l_sc[...] = alpha * l_sc[...] + jnp.sum(p, axis=-1, keepdims=True)
        acc_sc[...] = alpha * acc_sc[...] + jnp.dot(
            p.astype(v_ref.dtype), v_ref[0, 0], preferred_element_type=f32)
        m_sc[...] = m_new

    if causal:
        # skip kv tiles entirely above the diagonal (their DMA is also avoided
        # by the clamped index_map in the wrapper)
        @pl.when(ki * tk <= qi * tq + (tq - 1))
        def _():
            _attend()
    else:
        _attend()

    @pl.when(ki == nk - 1)
    def _():
        inv_l = pl.reciprocal(l_sc[...])        # exact; runs once per q tile
        o_ref[0, 0] = (acc_sc[...] * inv_l).astype(o_ref.dtype)


# --------------------------------------------------------------------------
# Kernel 3: out-projection, reduction over heads.  grid = (B, q-tiles, H)
# --------------------------------------------------------------------------
def _out_proj_kernel(o_ref, wo_ref, y_ref, acc_sc):
    # o_ref: (1,1,tq,dh)   wo_ref: (1,dh,D)   y_ref: (1,tq,D)   acc: (tq,D) f32
    h = pl.program_id(2)

    @pl.when(h == 0)
    def _():
        acc_sc[...] = jnp.zeros_like(acc_sc)

    acc_sc[...] += jnp.dot(o_ref[0, 0], wo_ref[0],
                           preferred_element_type=jnp.float32)

    @pl.when(h == pl.num_programs(2) - 1)
    def _():
        y_ref[0] = acc_sc[...].astype(y_ref.dtype)


# --------------------------------------------------------------------------
# Wrapper
# --------------------------------------------------------------------------
@functools.partial(jax.jit, static_argnames=("n_heads", "causal", "compute_dtype"))
def physics_informed_self_attention(x, physics_features, params, *,
                                    n_heads, causal=False, compute_dtype=None):
    """x: (B, S, D), physics_features: (B, S, P).  Returns (B, S, D)."""
    B, S, D = x.shape
    H = n_heads
    assert D % H == 0, "d_model must be divisible by n_heads"
    dh = D // H
    # For production, pass compute_dtype=jnp.bfloat16 (f32 accumulation is kept).
    cdt = x.dtype if compute_dtype is None else compute_dtype

    hi = jax.lax.Precision.HIGHEST
    w_in = params["w_in_proj"].astype(jnp.float32)    # (3D, D)  torch (out,in)
    w_phys = params["w_phys"].astype(jnp.float32)     # (D, P)
    w_out = params["w_out_proj"].astype(jnp.float32)  # (D, D)

    # Fold the physics bias into kw once (tiny matmul, done by XLA).
    kw = (x.astype(jnp.float32) +
          jnp.einsum("bsp,dp->bsd", physics_features.astype(jnp.float32),
                     w_phys, precision=hi)).astype(cdt)

    # Per-head (in, out)-layout QKV weights; fold 1/sqrt(dh) into Wq.
    w_qkv = jnp.transpose(w_in.reshape(3, H, dh, D), (0, 1, 3, 2))   # (3, H, D, dh)
    w_qkv = w_qkv.at[0].multiply(1.0 / math.sqrt(dh)).astype(cdt)
    # Per-head out-projection slices in (in, out) layout: (H, dh, D).
    w_o = jnp.transpose(w_out).reshape(H, dh, D).astype(cdt)

    # Tiles: q tile ~128, kv tile up to 512 (amortize grid-step overhead),
    # projection row tile up to 256.  VMEM stays far below the 32 MiB default
    # scoped limit (and v7x's 64 MiB physical), so no vmem_limit override.
    ts = _pick_tile(S, 256)
    tq = _pick_tile(S, 128)
    tk = _pick_tile(S, 512)
    ns, nq, nk = S // ts, S // tq, S // tk

    # -------- pass 1: per-head Q/K/V projection --------
    qkv_shape = jax.ShapeDtypeStruct((B, H, S, dh), cdt)
    q, k, v = pl.pallas_call(
        _qkv_proj_kernel,
        out_shape=(qkv_shape, qkv_shape, qkv_shape),
        grid_spec=pltpu.PrefetchScalarGridSpec(
            num_scalar_prefetch=0,
            grid=(B, H, ns),
            in_specs=[
                pl.BlockSpec((1, ts, D), lambda b, h, si: (b, si, 0)),
                pl.BlockSpec((3, 1, D, dh), lambda b, h, si: (0, h, 0, 0)),
            ],
            out_specs=[
                pl.BlockSpec((1, 1, ts, dh), lambda b, h, si: (b, h, si, 0)),
                pl.BlockSpec((1, 1, ts, dh), lambda b, h, si: (b, h, si, 0)),
                pl.BlockSpec((1, 1, ts, dh), lambda b, h, si: (b, h, si, 0)),
            ],
        ),
        compiler_params=pltpu.CompilerParams(
            dimension_semantics=("parallel", "parallel", "parallel")),
    )(kw, w_qkv)

    # -------- pass 2: flash attention per head --------
    if causal:
        def kv_index(b, h, qi, ki):
            # clamp to the last valid kv tile for this q tile -> fully masked
            # tiles keep the same block index and issue no new DMA
            kmax = (qi * tq + (tq - 1)) // tk
            return (b, h, jnp.minimum(ki, kmax), 0)
    else:
        def kv_index(b, h, qi, ki):
            return (b, h, ki, 0)

    o_heads = pl.pallas_call(
        functools.partial(_flash_attn_kernel, causal=causal),
        out_shape=jax.ShapeDtypeStruct((B, H, S, dh), cdt),
        grid_spec=pltpu.PrefetchScalarGridSpec(
            num_scalar_prefetch=0,
            grid=(B, H, nq, nk),
            in_specs=[
                pl.BlockSpec((1, 1, tq, dh), lambda b, h, qi, ki: (b, h, qi, 0)),
                pl.BlockSpec((1, 1, tk, dh), kv_index),
                pl.BlockSpec((1, 1, tk, dh), kv_index),
            ],
            out_specs=pl.BlockSpec((1, 1, tq, dh),
                                   lambda b, h, qi, ki: (b, h, qi, 0)),
            scratch_shapes=[
                pltpu.VMEM((tq, 1), jnp.float32),   # running max
                pltpu.VMEM((tq, 1), jnp.float32),   # running denominator
                pltpu.VMEM((tq, dh), jnp.float32),  # attention accumulator
            ],
        ),
        compiler_params=pltpu.CompilerParams(
            dimension_semantics=("parallel", "parallel", "parallel", "arbitrary")),
    )(q, k, v)

    # -------- pass 3: out-projection (reduction over heads) --------
    y = pl.pallas_call(
        _out_proj_kernel,
        out_shape=jax.ShapeDtypeStruct((B, S, D), x.dtype),
        grid_spec=pltpu.PrefetchScalarGridSpec(
            num_scalar_prefetch=0,
            grid=(B, nq, H),
            in_specs=[
                pl.BlockSpec((1, 1, tq, dh), lambda b, qi, h: (b, h, qi, 0)),
                pl.BlockSpec((1, dh, D), lambda b, qi, h: (h, 0, 0)),
            ],
            out_specs=pl.BlockSpec((1, tq, D), lambda b, qi, h: (b, qi, 0)),
            scratch_shapes=[pltpu.VMEM((tq, D), jnp.float32)],
        ),
        compiler_params=pltpu.CompilerParams(
            dimension_semantics=("parallel", "parallel", "arbitrary")),
    )(o_heads, w_o)
    return y


# --------------------------------------------------------------------------
# Pure-JAX reference (mirrors torch nn.MultiheadAttention, bias=False)
# --------------------------------------------------------------------------
def _reference(x, phys, params, n_heads, causal=False):
    hi = jax.lax.Precision.HIGHEST
    B, S, D = x.shape
    dh = D // n_heads
    kw = x + jnp.einsum("bsp,dp->bsd", phys, params["w_phys"], precision=hi)
    qkv = jnp.einsum("bsd,ed->bse", kw, params["w_in_proj"], precision=hi)
    q, k, v = qkv[..., :D], qkv[..., D:2 * D], qkv[..., 2 * D:]

    def split(t):
        return t.reshape(B, S, n_heads, dh).transpose(0, 2, 1, 3)

    qh, kh, vh = split(q), split(k), split(v)
    s = jnp.einsum("bhqd,bhkd->bhqk", qh, kh, precision=hi) / math.sqrt(dh)
    if causal:
        mask = jnp.triu(jnp.full((S, S), -jnp.inf), k=1)
        s = s + mask
    p = jax.nn.softmax(s, axis=-1)
    o = jnp.einsum("bhqk,bhkd->bhqd", p, vh, precision=hi)
    o = o.transpose(0, 2, 1, 3).reshape(B, S, D)
    return jnp.einsum("bsd,ed->bse", o, params["w_out_proj"], precision=hi)


if __name__ == "__main__":
    # Small shapes consistent with the module's forward.
    B, S, D, H, P = 2, 8, 32, 4, 18

    key = jax.random.PRNGKey(0)
    kx, kp, k1, k2, k3 = jax.random.split(key, 5)

    x = jax.random.normal(kx, (B, S, D), dtype=jnp.float32)
    physics_features = jax.random.normal(kp, (B, S, P), dtype=jnp.float32)

    # PyTorch Linear convention: weights are (out_features, in_features).
    params = {
        "w_phys": jax.random.normal(k1, (D, P), dtype=jnp.float32) / math.sqrt(P),
        "w_in_proj": jax.random.normal(k2, (3 * D, D), dtype=jnp.float32) / math.sqrt(D),
        "w_out_proj": jax.random.normal(k3, (D, D), dtype=jnp.float32) / math.sqrt(D),
    }

    for causal in (False, True):
        out = physics_informed_self_attention(x, physics_features, params,
                                               n_heads=H, causal=causal)
        out = jax.block_until_ready(out)
        ref = _reference(x, physics_features, params, H, causal=causal)
        assert out.shape == (B, S, D)
        assert jnp.allclose(out, ref, atol=2e-3, rtol=2e-3), \
            f"mismatch vs JAX reference (causal={causal}), " \
            f"max_abs_err={float(jnp.max(jnp.abs(out - ref)))}"

    print("KERNEL_OK")
</pallas_src>

<mosaic_0001>
module attributes {stable_mosaic.version = 11 : i64} {
  func.func @_flash_attn_kernel(%arg0: i32, %arg1: i32, %arg2: i32, %arg3: i32, %arg4: memref<1x1x8x8xf32, #tpu.memory_space<vmem>>, %arg5: memref<1x1x8x8xf32, #tpu.memory_space<vmem>>, %arg6: memref<1x1x8x8xf32, #tpu.memory_space<vmem>>, %arg7: memref<1x1x8x8xf32, #tpu.memory_space<vmem>>, %arg8: memref<8x1xf32, #tpu.memory_space<vmem>>, %arg9: memref<8x1xf32, #tpu.memory_space<vmem>>, %arg10: memref<8x8xf32, #tpu.memory_space<vmem>>) attributes {dimension_semantics = [#tpu.dimension_semantics<parallel>, #tpu.dimension_semantics<parallel>, #tpu.dimension_semantics<parallel>, #tpu.dimension_semantics<arbitrary>], iteration_bounds = array<i64: 2, 4, 1, 1>, scalar_prefetch = 0 : i64, scratch_operands = 3 : i64, tpu.core_type = #tpu.core_type<tc>, window_params = [{transform_indices = @transform_0, window_bounds = array<i64: 1, 1, 8, 8>}, {transform_indices = @transform_1, window_bounds = array<i64: 1, 1, 8, 8>}, {transform_indices = @transform_2, window_bounds = array<i64: 1, 1, 8, 8>}, {transform_indices = @transform_3, window_bounds = array<i64: 1, 1, 8, 8>}]} {
    %c0_i32 = arith.constant 0 : i32
    %0 = arith.cmpi eq, %arg3, %c0_i32 : i32
    %1 = arith.extui %0 : i1 to i32
    %c0_i32_0 = arith.constant 0 : i32
    %2 = arith.cmpi ne, %1, %c0_i32_0 : i32
    scf.if %2 {
      %cst_29 = arith.constant -1.000000e+30 : f32
      %35 = vector.broadcast %cst_29 : f32 to vector<8x1xf32>
      %c0_30 = arith.constant 0 : index
      %c0_31 = arith.constant 0 : index
      %36 = vector.load %arg8[%c0_30, %c0_31] : memref<8x1xf32, #tpu.memory_space<vmem>>, vector<8x1xf32>
      tpu.vector_store %arg8[%c0_30, %c0_31], %35 {strides = array<i32>} : memref<8x1xf32, #tpu.memory_space<vmem>>, vector<8x1xf32>,
      %cst_32 = arith.constant 0.000000e+00 : f32
      %37 = vector.broadcast %cst_32 : f32 to vector<8x1xf32>
      %c0_33 = arith.constant 0 : index
      %c0_34 = arith.constant 0 : index
      %38 = vector.load %arg9[%c0_33, %c0_34] : memref<8x1xf32, #tpu.memory_space<vmem>>, vector<8x1xf32>
      tpu.vector_store %arg9[%c0_33, %c0_34], %37 {strides = array<i32>} : memref<8x1xf32, #tpu.memory_space<vmem>>, vector<8x1xf32>,
      %cst_35 = arith.constant 0.000000e+00 : f32
      %39 = vector.broadcast %cst_35 : f32 to vector<8x8xf32>
      %c0_36 = arith.constant 0 : index
      %c0_37 = arith.constant 0 : index
      %40 = vector.load %arg10[%c0_36, %c0_37] : memref<8x8xf32, #tpu.memory_space<vmem>>, vector<8x8xf32>
      tpu.vector_store %arg10[%c0_36, %c0_37], %39 {strides = array<i32>} : memref<8x8xf32, #tpu.memory_space<vmem>>, vector<8x8xf32>,
    } else {
    }
    %c0 = arith.constant 0 : index
    %c0_1 = arith.constant 0 : index
    %c0_2 = arith.constant 0 : index
    %c0_3 = arith.constant 0 : index
    %3 = vector.load %arg4[%c0, %c0_1, %c0_2, %c0_3] : memref<1x1x8x8xf32, #tpu.memory_space<vmem>>, vector<1x1x8x8xf32>
    %4 = vector.shape_cast %3 : vector<1x1x8x8xf32> to vector<8x8xf32>
    %c0_4 = arith.constant 0 : index
    %c0_5 = arith.constant 0 : index
    %c0_6 = arith.constant 0 : index
    %c0_7 = arith.constant 0 : index
    %5 = vector.load %arg5[%c0_4, %c0_5, %c0_6, %c0_7] : memref<1x1x8x8xf32, #tpu.memory_space<vmem>>, vector<1x1x8x8xf32>
    %6 = vector.shape_cast %5 : vector<1x1x8x8xf32> to vector<8x8xf32>
    %cst = arith.constant dense<0.000000e+00> : vector<8x8xf32>
    %7 = tpu.matmul %4, %6, %cst {dimension_numbers = #tpu.dot_dimension_numbers<[1], [1], [0], [0], [0, 0, 1, 0], [], []>} : vector<8x8xf32>, vector<8x8xf32>, vector<8x8xf32> -> vector<8x8xf32>
    %c0_8 = arith.constant 0 : index
    %c0_9 = arith.constant 0 : index
    %8 = vector.load %arg8[%c0_8, %c0_9] : memref<8x1xf32, #tpu.memory_space<vmem>>, vector<8x1xf32>
    %cst_10 = arith.constant dense<0xFF800000> : vector<8xf32>
    %9 = vector.multi_reduction <maximumf>, %7, %cst_10 [1] : vector<8x8xf32> to vector<8xf32>
    %10 = vector.shape_cast %9 : vector<8xf32> to vector<8x1xf32>
    %11 = arith.maximumf %8, %10 : vector<8x1xf32>
    %12 = arith.subf %8, %11 : vector<8x1xf32>
    %13 = math.exp %12 : vector<8x1xf32>
    %14 = vector.broadcast %11 : vector<8x1xf32> to vector<8x8xf32>
    %15 = arith.subf %7, %14 : vector<8x8xf32>
    %16 = math.exp %15 : vector<8x8xf32>
    %c0_11 = arith.constant 0 : index
    %c0_12 = arith.constant 0 : index
    %17 = vector.load %arg9[%c0_11, %c0_12] : memref<8x1xf32, #tpu.memory_space<vmem>>, vector<8x1xf32>
    %18 = arith.mulf %13, %17 : vector<8x1xf32>
    %cst_13 = arith.constant dense<0.000000e+00> : vector<8xf32>
    %19 = vector.multi_reduction <add>, %16, %cst_13 [1] : vector<8x8xf32> to vector<8xf32>
    %20 = vector.shape_cast %19 : vector<8xf32> to vector<8x1xf32>
    %21 = arith.addf %18, %20 : vector<8x1xf32>
    %c0_14 = arith.constant 0 : index
    %c0_15 = arith.constant 0 : index
    %22 = vector.load %arg9[%c0_14, %c0_15] : memref<8x1xf32, #tpu.memory_space<vmem>>, vector<8x1xf32>
    tpu.vector_store %arg9[%c0_14, %c0_15], %21 {strides = array<i32>} : memref<8x1xf32, #tpu.memory_space<vmem>>, vector<8x1xf32>,
    %c0_16 = arith.constant 0 : index
    %c0_17 = arith.constant 0 : index
    %23 = vector.load %arg10[%c0_16, %c0_17] : memref<8x8xf32, #tpu.memory_space<vmem>>, vector<8x8xf32>
    %24 = vector.broadcast %13 : vector<8x1xf32> to vector<8x8xf32>
    %25 = arith.mulf %24, %23 : vector<8x8xf32>
    %c0_18 = arith.constant 0 : index
    %c0_19 = arith.constant 0 : index
    %c0_20 = arith.constant 0 : index
    %c0_21 = arith.constant 0 : index
    %26 = vector.load %arg6[%c0_18, %c0_19, %c0_20, %c0_21] : memref<1x1x8x8xf32, #tpu.memory_space<vmem>>, vector<1x1x8x8xf32>
    %27 = vector.shape_cast %26 : vector<1x1x8x8xf32> to vector<8x8xf32>
    %cst_22 = arith.constant dense<0.000000e+00> : vector<8x8xf32>
    %28 = tpu.matmul %16, %27, %cst_22 {dimension_numbers = #tpu.dot_dimension_numbers<[1], [0], [0], [1], [0, 0, 1, 1], [], []>} : vector<8x8xf32>, vector<8x8xf32>, vector<8x8xf32> -> vector<8x8xf32>
    %29 = arith.addf %25, %28 : vector<8x8xf32>
    %c0_23 = arith.constant 0 : index
    %c0_24 = arith.constant 0 : index
    %30 = vector.load %arg10[%c0_23, %c0_24] : memref<8x8xf32, #tpu.memory_space<vmem>>, vector<8x8xf32>
    tpu.vector_store %arg10[%c0_23, %c0_24], %29 {strides = array<i32>} : memref<8x8xf32, #tpu.memory_space<vmem>>, vector<8x8xf32>,
    %c0_25 = arith.constant 0 : index
    %c0_26 = arith.constant 0 : index
    %31 = vector.load %arg8[%c0_25, %c0_26] : memref<8x1xf32, #tpu.memory_space<vmem>>, vector<8x1xf32>
    tpu.vector_store %arg8[%c0_25, %c0_26], %11 {strides = array<i32>} : memref<8x1xf32, #tpu.memory_space<vmem>>, vector<8x1xf32>,
    %c0_i32_27 = arith.constant 0 : i32
    %32 = arith.cmpi eq, %arg3, %c0_i32_27 : i32
    %33 = arith.extui %32 : i1 to i32
    %c0_i32_28 = arith.constant 0 : i32
    %34 = arith.cmpi ne, %33, %c0_i32_28 : i32
    scf.if %34 {
      %c0_29 = arith.constant 0 : index
      %c0_30 = arith.constant 0 : index
      %35 = vector.load %arg9[%c0_29, %c0_30] : memref<8x1xf32, #tpu.memory_space<vmem>>, vector<8x1xf32>
      %36 = tpu.reciprocal %35 : vector<8x1xf32> -> vector<8x1xf32>
      %c0_31 = arith.constant 0 : index
      %c0_32 = arith.constant 0 : index
      %37 = vector.load %arg10[%c0_31, %c0_32] : memref<8x8xf32, #tpu.memory_space<vmem>>, vector<8x8xf32>
      %38 = vector.broadcast %36 : vector<8x1xf32> to vector<8x8xf32>
      %39 = arith.mulf %37, %38 : vector<8x8xf32>
      %c0_33 = arith.constant 0 : index
      %c0_34 = arith.constant 0 : index
      %c0_35 = arith.constant 0 : index
      %c0_36 = arith.constant 0 : index
      %40 = vector.load %arg7[%c0_33, %c0_34, %c0_35, %c0_36] : memref<1x1x8x8xf32, #tpu.memory_space<vmem>>, vector<1x1x8x8xf32>
      %41 = vector.shape_cast %40 : vector<1x1x8x8xf32> to vector<8x8xf32>
      %42 = vector.shape_cast %39 : vector<8x8xf32> to vector<1x1x8x8xf32>
      tpu.vector_store %arg7[%c0_33, %c0_34, %c0_35, %c0_36], %42 {strides = array<i32>} : memref<1x1x8x8xf32, #tpu.memory_space<vmem>>, vector<1x1x8x8xf32>,
    } else {
    }
    return
  }
  func.func @transform_0(%arg0: i32, %arg1: i32, %arg2: i32, %arg3: i32) -> (i32, i32, i32, i32) {
    %c0_i32 = arith.constant 0 : i32
    %c0_i32_0 = arith.constant 0 : i32
    return %arg0, %arg1, %arg2, %c0_i32 : i32, i32, i32, i32
  }
  func.func @transform_1(%arg0: i32, %arg1: i32, %arg2: i32, %arg3: i32) -> (i32, i32, i32, i32) {
    %c0_i32 = arith.constant 0 : i32
    %c0_i32_0 = arith.constant 0 : i32
    return %arg0, %arg1, %arg3, %c0_i32 : i32, i32, i32, i32
  }
  func.func @transform_2(%arg0: i32, %arg1: i32, %arg2: i32, %arg3: i32) -> (i32, i32, i32, i32) {
    %c0_i32 = arith.constant 0 : i32
    %c0_i32_0 = arith.constant 0 : i32
    return %arg0, %arg1, %arg3, %c0_i32 : i32, i32, i32, i32
  }
  func.func @transform_3(%arg0: i32, %arg1: i32, %arg2: i32, %arg3: i32) -> (i32, i32, i32, i32) {
    %c0_i32 = arith.constant 0 : i32
    %c0_i32_0 = arith.constant 0 : i32
    return %arg0, %arg1, %arg2, %c0_i32 : i32, i32, i32, i32
  }
}

module attributes {stable_mosaic.version = 11 : i64} {
  func.func @_qkv_proj_kernel(%arg0: i32, %arg1: i32, %arg2: i32, %arg3: memref<1x8x32xf32, #tpu.memory_space<vmem>>, %arg4: memref<3x1x32x8xf32, #tpu.memory_space<vmem>>, %arg5: memref<1x1x8x8xf32, #tpu.memory_space<vmem>>, %arg6: memref<1x1x8x8xf32, #tpu.memory_space<vmem>>, %arg7: memref<1x1x8x8xf32, #tpu.memory_space<vmem>>) attributes {dimension_semantics = [#tpu.dimension_semantics<parallel>, #tpu.dimension_semantics<parallel>, #tpu.dimension_semantics<parallel>], iteration_bounds = array<i64: 2, 4, 1>, scalar_prefetch = 0 : i64, scratch_operands = 0 : i64, tpu.core_type = #tpu.core_type<tc>, window_params = [{transform_indices = @transform_0, window_bounds = array<i64: 1, 8, 32>}, {transform_indices = @transform_1, window_bounds = array<i64: 3, 1, 32, 8>}, {transform_indices = @transform_2, window_bounds = array<i64: 1, 1, 8, 8>}, {transform_indices = @transform_3, window_bounds = array<i64: 1, 1, 8, 8>}, {transform_indices = @transform_4, window_bounds = array<i64: 1, 1, 8, 8>}]} {
    %c0 = arith.constant 0 : index
    %c0_0 = arith.constant 0 : index
    %c0_1 = arith.constant 0 : index
    %0 = vector.load %arg3[%c0, %c0_0, %c0_1] : memref<1x8x32xf32, #tpu.memory_space<vmem>>, vector<1x8x32xf32>
    %1 = vector.shape_cast %0 : vector<1x8x32xf32> to vector<8x32xf32>
    %c0_2 = arith.constant 0 : index
    %c0_3 = arith.constant 0 : index
    %c0_4 = arith.constant 0 : index
    %c0_5 = arith.constant 0 : index
    %2 = vector.load %arg4[%c0_2, %c0_3, %c0_4, %c0_5] : memref<3x1x32x8xf32, #tpu.memory_space<vmem>>, vector<1x1x32x8xf32>
    %3 = vector.shape_cast %2 : vector<1x1x32x8xf32> to vector<32x8xf32>
    %cst = arith.constant dense<0.000000e+00> : vector<8x8xf32>
    %4 = tpu.matmul %1, %3, %cst {dimension_numbers = #tpu.dot_dimension_numbers<[1], [0], [0], [1], [0, 0, 1, 1], [], []>} : vector<8x32xf32>, vector<32x8xf32>, vector<8x8xf32> -> vector<8x8xf32>
    %c0_6 = arith.constant 0 : index
    %c0_7 = arith.constant 0 : index
    %c0_8 = arith.constant 0 : index
    %c0_9 = arith.constant 0 : index
    %5 = vector.load %arg5[%c0_6, %c0_7, %c0_8, %c0_9] : memref<1x1x8x8xf32, #tpu.memory_space<vmem>>, vector<1x1x8x8xf32>
    %6 = vector.shape_cast %5 : vector<1x1x8x8xf32> to vector<8x8xf32>
    %7 = vector.shape_cast %4 : vector<8x8xf32> to vector<1x1x8x8xf32>
    tpu.vector_store %arg5[%c0_6, %c0_7, %c0_8, %c0_9], %7 {strides = array<i32>} : memref<1x1x8x8xf32, #tpu.memory_space<vmem>>, vector<1x1x8x8xf32>,
    %c1 = arith.constant 1 : index
    %c0_10 = arith.constant 0 : index
    %c0_11 = arith.constant 0 : index
    %c0_12 = arith.constant 0 : index
    %8 = vector.load %arg4[%c1, %c0_10, %c0_11, %c0_12] : memref<3x1x32x8xf32, #tpu.memory_space<vmem>>, vector<1x1x32x8xf32>
    %9 = vector.shape_cast %8 : vector<1x1x32x8xf32> to vector<32x8xf32>
    %cst_13 = arith.constant dense<0.000000e+00> : vector<8x8xf32>
    %10 = tpu.matmul %1, %9, %cst_13 {dimension_numbers = #tpu.dot_dimension_numbers<[1], [0], [0], [1], [0, 0, 1, 1], [], []>} : vector<8x32xf32>, vector<32x8xf32>, vector<8x8xf32> -> vector<8x8xf32>
    %c0_14 = arith.constant 0 : index
    %c0_15 = arith.constant 0 : index
    %c0_16 = arith.constant 0 : index
    %c0_17 = arith.constant 0 : index
    %11 = vector.load %arg6[%c0_14, %c0_15, %c0_16, %c0_17] : memref<1x1x8x8xf32, #tpu.memory_space<vmem>>, vector<1x1x8x8xf32>
    %12 = vector.shape_cast %11 : vector<1x1x8x8xf32> to vector<8x8xf32>
    %13 = vector.shape_cast %10 : vector<8x8xf32> to vector<1x1x8x8xf32>
    tpu.vector_store %arg6[%c0_14, %c0_15, %c0_16, %c0_17], %13 {strides = array<i32>} : memref<1x1x8x8xf32, #tpu.memory_space<vmem>>, vector<1x1x8x8xf32>,
    %c2 = arith.constant 2 : index
    %c0_18 = arith.constant 0 : index
    %c0_19 = arith.constant 0 : index
    %c0_20 = arith.constant 0 : index
    %14 = vector.load %arg4[%c2, %c0_18, %c0_19, %c0_20] : memref<3x1x32x8xf32, #tpu.memory_space<vmem>>, vector<1x1x32x8xf32>
    %15 = vector.shape_cast %14 : vector<1x1x32x8xf32> to vector<32x8xf32>
    %cst_21 = arith.constant dense<0.000000e+00> : vector<8x8xf32>
    %16 = tpu.matmul %1, %15, %cst_21 {dimension_numbers = #tpu.dot_dimension_numbers<[1], [0], [0], [1], [0, 0, 1, 1], [], []>} : vector<8x32xf32>, vector<32x8xf32>, vector<8x8xf32> -> vector<8x8xf32>
    %c0_22 = arith.constant 0 : index
    %c0_23 = arith.constant 0 : index
    %c0_24 = arith.constant 0 : index
    %c0_25 = arith.constant 0 : index
    %17 = vector.load %arg7[%c0_22, %c0_23, %c0_24, %c0_25] : memref<1x1x8x8xf32, #tpu.memory_space<vmem>>, vector<1x1x8x8xf32>
    %18 = vector.shape_cast %17 : vector<1x1x8x8xf32> to vector<8x8xf32>
    %19 = vector.shape_cast %16 : vector<8x8xf32> to vector<1x1x8x8xf32>
    tpu.vector_store %arg7[%c0_22, %c0_23, %c0_24, %c0_25], %19 {strides = array<i32>} : memref<1x1x8x8xf32, #tpu.memory_space<vmem>>, vector<1x1x8x8xf32>,
    return
  }
  func.func @transform_0(%arg0: i32, %arg1: i32, %arg2: i32) -> (i32, i32, i32) {
    %c0_i32 = arith.constant 0 : i32
    %c0_i32_0 = arith.constant 0 : i32
    return %arg0, %arg2, %c0_i32 : i32, i32, i32
  }
  func.func @transform_1(%arg0: i32, %arg1: i32, %arg2: i32) -> (i32, i32, i32, i32) {
    %c0_i32 = arith.constant 0 : i32
    %c0_i32_0 = arith.constant 0 : i32
    %c0_i32_1 = arith.constant 0 : i32
    %c0_i32_2 = arith.constant 0 : i32
    return %c0_i32, %arg1, %c0_i32_0, %c0_i32_1 : i32, i32, i32, i32
  }
  func.func @transform_2(%arg0: i32, %arg1: i32, %arg2: i32) -> (i32, i32, i32, i32) {
    %c0_i32 = arith.constant 0 : i32
    %c0_i32_0 = arith.constant 0 : i32
    return %arg0, %arg1, %arg2, %c0_i32 : i32, i32, i32, i32
  }
  func.func @transform_3(%arg0: i32, %arg1: i32, %arg2: i32) -> (i32, i32, i32, i32) {
    %c0_i32 = arith.constant 0 : i32
    %c0_i32_0 = arith.constant 0 : i32
    return %arg0, %arg1, %arg2, %c0_i32 : i32, i32, i32, i32
  }
  func.func @transform_4(%arg0: i32, %arg1: i32, %arg2: i32) -> (i32, i32, i32, i32) {
    %c0_i32 = arith.constant 0 : i32
    %c0_i32_0 = arith.constant 0 : i32
    return %arg0, %arg1, %arg2, %c0_i32 : i32, i32, i32, i32
  }
}

module attributes {stable_mosaic.version = 11 : i64} {
  func.func @_out_proj_kernel(%arg0: i32, %arg1: i32, %arg2: i32, %arg3: memref<1x1x8x8xf32, #tpu.memory_space<vmem>>, %arg4: memref<1x8x32xf32, #tpu.memory_space<vmem>>, %arg5: memref<1x8x32xf32, #tpu.memory_space<vmem>>, %arg6: memref<8x32xf32, #tpu.memory_space<vmem>>) attributes {dimension_semantics = [#tpu.dimension_semantics<parallel>, #tpu.dimension_semantics<parallel>, #tpu.dimension_semantics<arbitrary>], iteration_bounds = array<i64: 2, 1, 4>, scalar_prefetch = 0 : i64, scratch_operands = 1 : i64, tpu.core_type = #tpu.core_type<tc>, window_params = [{transform_indices = @transform_0, window_bounds = array<i64: 1, 1, 8, 8>}, {transform_indices = @transform_1, window_bounds = array<i64: 1, 8, 32>}, {transform_indices = @transform_2, window_bounds = array<i64: 1, 8, 32>}]} {
    %c0_i32 = arith.constant 0 : i32
    %0 = arith.cmpi eq, %arg2, %c0_i32 : i32
    %1 = arith.extui %0 : i1 to i32
    %c0_i32_0 = arith.constant 0 : i32
    %2 = arith.cmpi ne, %1, %c0_i32_0 : i32
    scf.if %2 {
      %cst_12 = arith.constant 0.000000e+00 : f32
      %14 = vector.broadcast %cst_12 : f32 to vector<8x32xf32>
      %c0_13 = arith.constant 0 : index
      %c0_14 = arith.constant 0 : index
      %15 = vector.load %arg6[%c0_13, %c0_14] : memref<8x32xf32, #tpu.memory_space<vmem>>, vector<8x32xf32>
      tpu.vector_store %arg6[%c0_13, %c0_14], %14 {strides = array<i32>} : memref<8x32xf32, #tpu.memory_space<vmem>>, vector<8x32xf32>,
    } else {
    }
    %c0 = arith.constant 0 : index
    %c0_1 = arith.constant 0 : index
    %3 = vector.load %arg6[%c0, %c0_1] : memref<8x32xf32, #tpu.memory_space<vmem>>, vector<8x32xf32>
    %c0_2 = arith.constant 0 : index
    %c0_3 = arith.constant 0 : index
    %c0_4 = arith.constant 0 : index
    %c0_5 = arith.constant 0 : index
    %4 = vector.load %arg3[%c0_2, %c0_3, %c0_4, %c0_5] : memref<1x1x8x8xf32, #tpu.memory_space<vmem>>, vector<1x1x8x8xf32>
    %5 = vector.shape_cast %4 : vector<1x1x8x8xf32> to vector<8x8xf32>
    %c0_6 = arith.constant 0 : index
    %c0_7 = arith.constant 0 : index
    %c0_8 = arith.constant 0 : index
    %6 = vector.load %arg4[%c0_6, %c0_7, %c0_8] : memref<1x8x32xf32, #tpu.memory_space<vmem>>, vector<1x8x32xf32>
    %7 = vector.shape_cast %6 : vector<1x8x32xf32> to vector<8x32xf32>
    %cst = arith.constant dense<0.000000e+00> : vector<8x32xf32>
    %8 = tpu.matmul %5, %7, %cst {dimension_numbers = #tpu.dot_dimension_numbers<[1], [0], [0], [1], [0, 0, 1, 1], [], []>} : vector<8x8xf32>, vector<8x32xf32>, vector<8x32xf32> -> vector<8x32xf32>
    %9 = arith.addf %3, %8 : vector<8x32xf32>
    %c0_9 = arith.constant 0 : index
    %c0_10 = arith.constant 0 : index
    %10 = vector.load %arg6[%c0_9, %c0_10] : memref<8x32xf32, #tpu.memory_space<vmem>>, vector<8x32xf32>
    tpu.vector_store %arg6[%c0_9, %c0_10], %9 {strides = array<i32>} : memref<8x32xf32, #tpu.memory_space<vmem>>, vector<8x32xf32>,
    %c3_i32 = arith.constant 3 : i32
    %11 = arith.cmpi eq, %arg2, %c3_i32 : i32
    %12 = arith.extui %11 : i1 to i32
    %c0_i32_11 = arith.constant 0 : i32
    %13 = arith.cmpi ne, %12, %c0_i32_11 : i32
    scf.if %13 {
      %c0_12 = arith.constant 0 : index
      %c0_13 = arith.constant 0 : index
      %14 = vector.load %arg6[%c0_12, %c0_13] : memref<8x32xf32, #tpu.memory_space<vmem>>, vector<8x32xf32>
      %c0_14 = arith.constant 0 : index
      %c0_15 = arith.constant 0 : index
      %c0_16 = arith.constant 0 : index
      %15 = vector.load %arg5[%c0_14, %c0_15, %c0_16] : memref<1x8x32xf32, #tpu.memory_space<vmem>>, vector<1x8x32xf32>
      %16 = vector.shape_cast %15 : vector<1x8x32xf32> to vector<8x32xf32>
      %17 = vector.shape_cast %14 : vector<8x32xf32> to vector<1x8x32xf32>
      tpu.vector_store %arg5[%c0_14, %c0_15, %c0_16], %17 {strides = array<i32>} : memref<1x8x32xf32, #tpu.memory_space<vmem>>, vector<1x8x32xf32>,
    } else {
    }
    return
  }
  func.func @transform_0(%arg0: i32, %arg1: i32, %arg2: i32) -> (i32, i32, i32, i32) {
    %c0_i32 = arith.constant 0 : i32
    %c0_i32_0 = arith.constant 0 : i32
    return %arg0, %arg2, %arg1, %c0_i32 : i32, i32, i32, i32
  }
  func.func @transform_1(%arg0: i32, %arg1: i32, %arg2: i32) -> (i32, i32, i32) {
    %c0_i32 = arith.constant 0 : i32
    %c0_i32_0 = arith.constant 0 : i32
    %c0_i32_1 = arith.constant 0 : i32
    return %arg2, %c0_i32, %c0_i32_0 : i32, i32, i32
  }
  func.func @transform_2(%arg0: i32, %arg1: i32, %arg2: i32) -> (i32, i32, i32) {
    %c0_i32 = arith.constant 0 : i32
    %c0_i32_0 = arith.constant 0 : i32
    return %arg0, %arg1, %c0_i32 : i32, i32, i32
  }
}

</mosaic_0001>

<llo_original>
// kernel: physics_informed_self_attention.3
$region0: #{physics_informed_self_attention.3}
  #allocation0 [shape = 'u32[]', space=smem, size = 0x4, offset = 0x4, fixed_abs, tag = 'smem constant byte address 0x4 - core index']
  #allocation1 [shape = 'u32[72,128]{1,0:T(1,128)}', space=vmem, size = 0x9000, scoped, tag = 'internal scratch']
  %s0 = inlined_call_operand.vmem [shape: f32[2,8,32], index: 0, kind: input, shape index: {}]
  %s1 = inlined_call_operand.vmem [shape: f32[3,4,32,8], index: 1, kind: input, shape index: {}]
  %s2 = inlined_call_operand.vmem [shape: f32[2,4,8,8], index: 2, kind: output, shape index: {0}]
  %s3 = inlined_call_operand.vmem [shape: f32[2,4,8,8], index: 3, kind: output, shape index: {1}]
  %s4 = inlined_call_operand.vmem [shape: f32[2,4,8,8], index: 4, kind: output, shape index: {2}]
  %5 = xla_tuple %s2, %s3, %s4
  %s6 = sld [smem:[#allocation0]]
  $region95: #{physics_informed_self_attention.3} parent=0
    _
  %s8 = ssub.s32 1, %s6
  %s9 = scalar_select 0, %s8, %s6
  $region1: #{physics_informed_self_attention.3} parent=0
    #allocation2 [shape = 'u8[98304]{0}', space=vmem, size = 0x18000, scoped, tag = 'input window, operand 1']
    loop: start=0, step=1, limit=10
    $region2: #{physics_informed_self_attention.3} parent=1 // loop_pre_header
      _
    $region3: #{physics_informed_self_attention.3} parent=1 // loop_header
      %s11 = sphi 0, %s15
      %p12 = scmp.ge.s32.totalorder %s11, 10
      %s18 = sphi 0, %s37
      %s19 = sphi 0, %s33
      %s20 = sphi 0, %s29
      %s21 = sphi 0, %s18
      %s22 = sphi 0, %s19
      %s23 = sphi 0, %s20
      %s24 = sphi 0, %s21
      %s25 = sphi 0, %s22
      %s26 = sphi 0, %s23
      %s42 = sphi 0, %s44
      %s45 = sphi 0, %s42
      %s46 = sphi 0, %s45
      %s62 = sphi 0, %s46
      %s68 = sphi 0, %s70
      %s71 = sphi 0, %s68
      %s72 = sphi 0, %s71
      %s88 = sphi 0, %s72
      %s98 = sphi 0, %s100
      %s101 = sphi 0, %s98
      %s102 = sphi 0, %s101
      %s118 = sphi 0, %s102
      %s128 = sphi 0, %s130
      %s131 = sphi 0, %s128
      %s132 = sphi 0, %s131
      %s148 = sphi 0, %s132
      %s158 = sphi 0, %s160
      %s161 = sphi 0, %s158
      %s162 = sphi 0, %s161
      %s178 = sphi 0, %s162
    $region4: #{physics_informed_self_attention.3} parent=1 // loop_header_branch
      %14 = sbr.rel (%p12) target = $region8
    $region5: #{physics_informed_self_attention.3} parent=1 // loop_body
      %s16 = ssub.s32 %s11, 1
      %s17 = ssub.s32 %s11, 2
      %s27 = sadd.s32 1, %s20
      %p28 = scmp.ge.s32.totalorder %s27, 1
      %s29 = scalar_select %p28, 0, %s27
      %s30 = sadd.s32 1, %s19
      %s31 = scalar_select %p28, %s30, %s19
      %p32 = scmp.ge.s32.totalorder %s31, 4
      %s33 = scalar_select %p32, 0, %s31
      %s34 = sadd.s32 1, %s18
      %s35 = scalar_select %p32, %s34, %s18
      %p36 = scmp.ge.s32.totalorder %s35, 2
      %s37 = scalar_select %p36, 0, %s35
      %s38 = ssub.s32 %s18, %s37
      %s39 = ssub.s32 %s20, %s29
      %s40 = sor.u32 %s38, %s39
      %p41 = scmp.eq.s32.totalorder %s40, 0
      %s43 = sadd.s32 %s42, 1
      %s44 = scalar_select %p41, %s42, %s43
      %p47 = pneg %p41
      %p48 = scmp.eq.s32.totalorder %s11, 7
      %p49 = por %p47, %p48
      %p50 = scmp.ne.s32.totalorder %s42, %s45
      %p51 = scmp.eq.s32.totalorder %s11, 0
      %p52 = por %p50, %p51
      %p53 = scmp.ne.s32.totalorder %s42, %s45
      %p54 = scmp.eq.s32.totalorder %s16, 7
      %p55 = por %p53, %p54
      %p56 = scmp.ne.s32.totalorder %s45, %s46
      %p57 = scmp.eq.s32.totalorder %s16, 0
      %p58 = por %p56, %p57
      %p59 = scmp.ne.s32.totalorder %s45, %s46
      %p60 = scmp.eq.s32.totalorder %s17, 7
      %p61 = por %p59, %p60
      %p63 = scmp.ne.s32.totalorder %s46, %s62
      %p64 = scmp.eq.s32.totalorder %s17, 0
      %p65 = por %p63, %p64
      %s66 = ssub.s32 %s19, %s33
      %p67 = scmp.eq.s32.totalorder %s66, 0
      %s69 = sadd.s32 %s68, 1
      %s70 = scalar_select %p67, %s68, %s69
      %p73 = pneg %p67
      %p74 = scmp.eq.s32.totalorder %s11, 7
      %p75 = por %p73, %p74
      %p76 = scmp.ne.s32.totalorder %s68, %s71
      %p77 = scmp.eq.s32.totalorder %s11, 0
      %p78 = por %p76, %p77
      %p79 = scmp.ne.s32.totalorder %s68, %s71
      %p80 = scmp.eq.s32.totalorder %s16, 7
      %p81 = por %p79, %p80
      %p82 = scmp.ne.s32.totalorder %s71, %s72
      %p83 = scmp.eq.s32.totalorder %s16, 0
      %p84 = por %p82, %p83
      %p85 = scmp.ne.s32.totalorder %s71, %s72
      %p86 = scmp.eq.s32.totalorder %s17, 7
      %p87 = por %p85, %p86
      %p89 = scmp.ne.s32.totalorder %s72, %s88
      %p90 = scmp.eq.s32.totalorder %s17, 0
      %p91 = por %p89, %p90
      %s92 = ssub.s32 %s18, %s37
      %s93 = ssub.s32 %s19, %s33
      %s94 = sor.u32 %s92, %s93
      %s95 = ssub.s32 %s20, %s29
      %s96 = sor.u32 %s94, %s95
      %p97 = scmp.eq.s32.totalorder %s96, 0
      %s99 = sadd.s32 %s98, 1
      %s100 = scalar_select %p97, %s98, %s99
      %p103 = pneg %p97
      %p104 = scmp.eq.s32.totalorder %s11, 7
      %p105 = por %p103, %p104
      %p106 = scmp.ne.s32.totalorder %s98, %s101
      %p107 = scmp.eq.s32.totalorder %s11, 0
      %p108 = por %p106, %p107
      %p109 = scmp.ne.s32.totalorder %s98, %s101
      %p110 = scmp.eq.s32.totalorder %s16, 7
      %p111 = por %p109, %p110
      %p112 = scmp.ne.s32.totalorder %s101, %s102
      %p113 = scmp.eq.s32.totalorder %s16, 0
      %p114 = por %p112, %p113
      %p115 = scmp.ne.s32.totalorder %s101, %s102
      %p116 = scmp.eq.s32.totalorder %s17, 7
      %p117 = por %p115, %p116
      %p119 = scmp.ne.s32.totalorder %s102, %s118
      %p120 = scmp.eq.s32.totalorder %s17, 0
      %p121 = por %p119, %p120
      %s122 = ssub.s32 %s18, %s37
      %s123 = ssub.s32 %s19, %s33
      %s124 = sor.u32 %s122, %s123
      %s125 = ssub.s32 %s20, %s29
      %s126 = sor.u32 %s124, %s125
      %p127 = scmp.eq.s32.totalorder %s126, 0
      %s129 = sadd.s32 %s128, 1
      %s130 = scalar_select %p127, %s128, %s129
      %p133 = pneg %p127
      %p134 = scmp.eq.s32.totalorder %s11, 7
      %p135 = por %p133, %p134
      %p136 = scmp.ne.s32.totalorder %s128, %s131
      %p137 = scmp.eq.s32.totalorder %s11, 0
      %p138 = por %p136, %p137
      %p139 = scmp.ne.s32.totalorder %s128, %s131
      %p140 = scmp.eq.s32.totalorder %s16, 7
      %p141 = por %p139, %p140
      %p142 = scmp.ne.s32.totalorder %s131, %s132
      %p143 = scmp.eq.s32.totalorder %s16, 0
      %p144 = por %p142, %p143
      %p145 = scmp.ne.s32.totalorder %s131, %s132
      %p146 = scmp.eq.s32.totalorder %s17, 7
      %p147 = por %p145, %p146
      %p149 = scmp.ne.s32.totalorder %s132, %s148
      %p150 = scmp.eq.s32.totalorder %s17, 0
      %p151 = por %p149, %p150
      %s152 = ssub.s32 %s18, %s37
      %s153 = ssub.s32 %s19, %s33
      %s154 = sor.u32 %s152, %s153
      %s155 = ssub.s32 %s20, %s29
      %s156 = sor.u32 %s154, %s155
      %p157 = scmp.eq.s32.totalorder %s156, 0
      %s159 = sadd.s32 %s158, 1
      %s160 = scalar_select %p157, %s158, %s159
      %p163 = pneg %p157
      %p164 = scmp.eq.s32.totalorder %s11, 7
      %p165 = por %p163, %p164
      %p166 = scmp.ne.s32.totalorder %s158, %s161
      %p167 = scmp.eq.s32.totalorder %s11, 0
      %p168 = por %p166, %p167
      %p169 = scmp.ne.s32.totalorder %s158, %s161
      %p170 = scmp.eq.s32.totalorder %s16, 7
      %p171 = por %p169, %p170
      %p172 = scmp.ne.s32.totalorder %s161, %s162
      %p173 = scmp.eq.s32.totalorder %s16, 0
      %p174 = por %p172, %p173
      %p175 = scmp.ne.s32.totalorder %s161, %s162
      %p176 = scmp.eq.s32.totalorder %s17, 7
      %p177 = por %p175, %p176
      %p179 = scmp.ne.s32.totalorder %s162, %s178
      %p180 = scmp.eq.s32.totalorder %s17, 0
      %p181 = por %p179, %p180
      %p182 = scmp.le.s32.totalorder 1, %s11
      %p183 = scmp.lt.s32.totalorder %s11, 9
      %p184 = pnand %p182, %p183
      %p185 = pneg %p184
      // Predicated region
      $region9: #{physics_informed_self_attention.3} parent=5 // pred_check
        _
      $region10: #{physics_informed_self_attention.3} parent=5 // pred_check_branch
        %187 = sbr.rel (%p184) target = $region12
      $region11: #{physics_informed_self_attention.3} parent=5 // pred_region
        %s188 = ssub.s32 %s11, 1
      $region12: #{physics_informed_self_attention.3} parent=5 // pred_fallthru
        _
      %p189 = scmp.lt.s32.totalorder %s11, 8
      // Predicated region
      $region13: #{physics_informed_self_attention.3} parent=5 // pred_check
        %p190 = pneg %p189
      $region14: #{physics_informed_self_attention.3} parent=5 // pred_check_branch
        %192 = sbr.rel (%p190) target = $region16
      $region15: #{physics_informed_self_attention.3} parent=5 // pred_region
        // Predicated region
        $region17: #{physics_informed_self_attention.3} parent=15 // pred_check
          %p193 = pneg %p52
        $region18: #{physics_informed_self_attention.3} parent=15 // pred_check_branch
          %195 = sbr.rel (%p193) target = $region20
        $region19: #{physics_informed_self_attention.3} parent=15 // pred_region
          %p196 = scmp.lt.s32.totalorder %s18, 1
          %s197 = scalar_select %p196, %s18, 1
          %p198 = scmp.lt.s32.totalorder %s20, 0
          %s199 = scalar_select %p198, %s20, 0
          %s200 = sadd.s32 %s199, %s197
          %s201 = smul.addr %s200, 8
          %s202 = scalar_lea.vmem %s0, %s201
        $region20: #{physics_informed_self_attention.3} parent=15 // pred_fallthru
          _
        // Predicated region
        $region21: #{physics_informed_self_attention.3} parent=15 // pred_check
          %p203 = pneg %p78
        $region22: #{physics_informed_self_attention.3} parent=15 // pred_check_branch
          %205 = sbr.rel (%p203) target = $region24
        $region23: #{physics_informed_self_attention.3} parent=15 // pred_region
          %s206 = sand.u32 %s68, 1
          %s207 = sand.u32 %s68, 1
          %s208 = smul.addr %s207, 96
          %s209 = scalar_lea.vmem [#allocation2], %s208
          %s210 = smul.addr %s19, 4
          %s211 = smul.addr %s210, 8
          %s212 = scalar_lea.vmem %s1, %s211
          // Predicated region
          $region25: #{physics_informed_self_attention.3} parent=23 // pred_check
            _
          $region26: #{physics_informed_self_attention.3} parent=23 // pred_check_branch
            %214 = sbr.rel (0) target = $region28
          $region27: #{physics_informed_self_attention.3} parent=23 // pred_region
            // Predicated region
            $region29: #{physics_informed_self_attention.3} parent=27 // pred_check
              _
            $region30: #{physics_informed_self_attention.3} parent=27 // pred_check_branch
              %216 = sbr.rel (0) target = $region32
            $region31: #{physics_informed_self_attention.3} parent=27 // pred_region
              // Predicated region
              $region44: #{physics_informed_self_attention.3} parent=31 // pred_check
                _
              $region45: #{physics_informed_self_attention.3} parent=31 // pred_check_branch
                %254 = sbr.rel (0) target = $region47
              $region46: #{physics_informed_self_attention.3} parent=31 // pred_region
                loop: start=0, step=1, limit=1
                $region48: #{physics_informed_self_attention.3} parent=46 // loop_pre_header
                  _
                $region49: #{physics_informed_self_attention.3} parent=46 // loop_header
                  %s256 = sphi 0, %s260
                  %p257 = scmp.ge.s32.totalorder %s256, 1
                  %s261 = sphi %s212, %s212
                  %s262 = sphi %s209, %s209
                $region50: #{physics_informed_self_attention.3} parent=46 // loop_header_branch
                  %259 = sbr.rel (%p257) target = $region54
                $region51: #{physics_informed_self_attention.3} parent=46 // loop_body
                  %v263 = vld [vmem:[%s261] sm:$0xff]
                  %264 = vst [vmem:[%s262] sm:$0xff] %v263
                  %v265 = vld [vmem:[%s261 + $0x8] sm:$0xff]
                  %266 = vst [vmem:[%s262 + $0x8] sm:$0xff] %v265
                  %v267 = vld [vmem:[%s261 + $0x10] sm:$0xff]
                  %268 = vst [vmem:[%s262 + $0x10] sm:$0xff] %v267
                  %v269 = vld [vmem:[%s261 + $0x18] sm:$0xff]
                  %270 = vst [vmem:[%s262 + $0x18] sm:$0xff] %v269
                  %v271 = vld [vmem:[%s261 + $0x80] sm:$0xff]
                  %272 = vst [vmem:[%s262 + $0x20] sm:$0xff] %v271
                  %v273 = vld [vmem:[%s261 + $0x88] sm:$0xff]
                  %274 = vst [vmem:[%s262 + $0x28] sm:$0xff] %v273
                  %v275 = vld [vmem:[%s261 + $0x90] sm:$0xff]
                  %276 = vst [vmem:[%s262 + $0x30] sm:$0xff] %v275
                  %v277 = vld [vmem:[%s261 + $0x98] sm:$0xff]
                  %278 = vst [vmem:[%s262 + $0x38] sm:$0xff] %v277
                  %v279 = vld [vmem:[%s261 + $0x100] sm:$0xff]
                  %280 = vst [vmem:[%s262 + $0x40] sm:$0xff] %v279
                  %v281 = vld [vmem:[%s261 + $0x108] sm:$0xff]
                  %282 = vst [vmem:[%s262 + $0x48] sm:$0xff] %v281
                  %v283 = vld [vmem:[%s261 + $0x110] sm:$0xff]
                  %284 = vst [vmem:[%s262 + $0x50] sm:$0xff] %v283
                  %v285 = vld [vmem:[%s261 + $0x118] sm:$0xff]
                  %286 = vst [vmem:[%s262 + $0x58] sm:$0xff] %v285
                $region52: #{physics_informed_self_attention.3} parent=46 // loop_footer
                  %s260 = sadd.s32 1, %s256
                $region53: #{physics_informed_self_attention.3} parent=46 // loop_footer_branch
                  %255 = sbr.rel target = $region49
                $region54: #{physics_informed_self_attention.3} parent=46 // loop_exit
                  _
              $region47: #{physics_informed_self_attention.3} parent=31 // pred_fallthru
                _
              // Predicated region
              $region55: #{physics_informed_self_attention.3} parent=31 // pred_check
                _
              $region56: #{physics_informed_self_attention.3} parent=31 // pred_check_branch
                %288 = sbr.rel target = $region58
              $region57: #{physics_informed_self_attention.3} parent=31 // pred_region
                _
              $region58: #{physics_informed_self_attention.3} parent=31 // pred_fallthru
                _
            $region32: #{physics_informed_self_attention.3} parent=27 // pred_fallthru
              _
            // Predicated region
            $region33: #{physics_informed_self_attention.3} parent=27 // pred_check
              _
            $region34: #{physics_informed_self_attention.3} parent=27 // pred_check_branch
              %218 = sbr.rel target = $region36
            $region35: #{physics_informed_self_attention.3} parent=27 // pred_region
              %s220 = ssub.s32 256, 1
              loop: start=0, step=1, limit=1
              $region37: #{physics_informed_self_attention.3} parent=35 // loop_pre_header
                _
              $region38: #{physics_informed_self_attention.3} parent=35 // loop_header
                %s222 = sphi 0, %s226
                %p223 = scmp.ge.s32.totalorder %s222, 1
                %s227 = sphi %s212, %s212
                %s228 = sphi %s209, %s209
              $region39: #{physics_informed_self_attention.3} parent=35 // loop_header_branch
                %225 = sbr.rel (%p223) target = $region43
              $region40: #{physics_informed_self_attention.3} parent=35 // loop_body
                %v229 = vld [vmem:[%s227] sm:%s220]
                %230 = vst [vmem:[%s228] sm:%s220] %v229
                %v231 = vld [vmem:[%s227 + $0x8] sm:%s220]
                %232 = vst [vmem:[%s228 + $0x8] sm:%s220] %v231
                %v233 = vld [vmem:[%s227 + $0x10] sm:%s220]
                %234 = vst [vmem:[%s228 + $0x10] sm:%s220] %v233
                %v235 = vld [vmem:[%s227 + $0x18] sm:%s220]
                %236 = vst [vmem:[%s228 + $0x18] sm:%s220] %v235
                %v237 = vld [vmem:[%s227 + $0x80] sm:%s220]
                %238 = vst [vmem:[%s228 + $0x20] sm:%s220] %v237
                %v239 = vld [vmem:[%s227 + $0x88] sm:%s220]
                %240 = vst [vmem:[%s228 + $0x28] sm:%s220] %v239
                %v241 = vld [vmem:[%s227 + $0x90] sm:%s220]
                %242 = vst [vmem:[%s228 + $0x30] sm:%s220] %v241
                %v243 = vld [vmem:[%s227 + $0x98] sm:%s220]
                %244 = vst [vmem:[%s228 + $0x38] sm:%s220] %v243
                %v245 = vld [vmem:[%s227 + $0x100] sm:%s220]
                %246 = vst [vmem:[%s228 + $0x40] sm:%s220] %v245
                %v247 = vld [vmem:[%s227 + $0x108] sm:%s220]
                %248 = vst [vmem:[%s228 + $0x48] sm:%s220] %v247
                %v249 = vld [vmem:[%s227 + $0x110] sm:%s220]
                %250 = vst [vmem:[%s228 + $0x50] sm:%s220] %v249
                %v251 = vld [vmem:[%s227 + $0x118] sm:%s220]
                %252 = vst [vmem:[%s228 + $0x58] sm:%s220] %v251
              $region41: #{physics_informed_self_attention.3} parent=35 // loop_footer
                %s226 = sadd.s32 1, %s222
              $region42: #{physics_informed_self_attention.3} parent=35 // loop_footer_branch
                %221 = sbr.rel target = $region38
              $region43: #{physics_informed_self_attention.3} parent=35 // loop_exit
                _
            $region36: #{physics_informed_self_attention.3} parent=27 // pred_fallthru
              _
          $region28: #{physics_informed_self_attention.3} parent=23 // pred_fallthru
            _
          %289 = vnop
        $region24: #{physics_informed_self_attention.3} parent=15 // pred_fallthru
          _
      $region16: #{physics_informed_self_attention.3} parent=5 // pred_fallthru
        _
      %p290 = scmp.le.s32.totalorder 1, %s11
      %p291 = scmp.lt.s32.totalorder %s11, 9
      %p292 = pnand %p290, %p291
      %p293 = pneg %p292
      // Predicated region
      $region59: #{physics_informed_self_attention.3} parent=5 // pred_check
        _
      $region60: #{physics_informed_self_attention.3} parent=5 // pred_check_branch
        %295 = sbr.rel (%p292) target = $region62
      $region61: #{physics_informed_self_attention.3} parent=5 // pred_region
        %s296 = ssub.s32 %s11, 1
        %s297 = sand.u32 %s71, 1
        %s298 = sand.u32 %s71, 1
        %s299 = smul.addr %s298, 96
        %s300 = scalar_lea.vmem [#allocation2], %s299
        // Predicated region
        $region63: #{physics_informed_self_attention.3} parent=61 // pred_check
          %p301 = pneg %p84
        $region64: #{physics_informed_self_attention.3} parent=61 // pred_check_branch
          %303 = sbr.rel (%p301) target = $region66
        $region65: #{physics_informed_self_attention.3} parent=61 // pred_region
          _
        $region66: #{physics_informed_self_attention.3} parent=61 // pred_fallthru
          _
        %p304 = scmp.lt.s32.totalorder %s21, 1
        %s305 = scalar_select %p304, %s21, 1
        %p306 = scmp.lt.s32.totalorder %s23, 0
        %s307 = scalar_select %p306, %s23, 0
        %s308 = sadd.s32 %s307, %s305
        %s309 = smul.addr %s308, 8
        %s310 = scalar_lea.vmem %s0, %s309
        %p311 = pneg %p58
        %p312 = pneg %p55
        %s313 = sand.u32 %s71, 1
        %s314 = sand.u32 %s71, 1
        %s315 = smul.addr %s314, 96
        %s316 = scalar_lea.vmem [#allocation2], %s315
        %p317 = pneg %p84
        %p318 = pneg %p81
        %p319 = pneg %p114
        %p320 = pneg %p111
        %p321 = scmp.lt.s32.totalorder %s21, 1
        %s322 = scalar_select %p321, %s21, 1
        %p323 = scmp.lt.s32.totalorder %s22, 3
        %s324 = scalar_select %p323, %s22, 3
        %p325 = scmp.lt.s32.totalorder %s23, 0
        %s326 = scalar_select %p325, %s23, 0
        %s327 = sadd.s32 %s326, %s324
        %s328 = smul.addr %s322, 4
        %s329 = sadd.s32 %s327, %s328
        %s330 = smul.addr %s329, 8
        %s331 = scalar_lea.vmem %s2, %s330
        %p332 = pneg %p144
        %p333 = pneg %p141
        %p334 = scmp.lt.s32.totalorder %s21, 1
        %s335 = scalar_select %p334, %s21, 1
        %p336 = scmp.lt.s32.totalorder %s22, 3
        %s337 = scalar_select %p336, %s22, 3
        %p338 = scmp.lt.s32.totalorder %s23, 0
        %s339 = scalar_select %p338, %s23, 0
        %s340 = sadd.s32 %s339, %s337
        %s341 = smul.addr %s335, 4
        %s342 = sadd.s32 %s340, %s341
        %s343 = smul.addr %s342, 8
        %s344 = scalar_lea.vmem %s3, %s343
        %p345 = pneg %p174
        %p346 = pneg %p171
        %p347 = scmp.lt.s32.totalorder %s21, 1
        %s348 = scalar_select %p347, %s21, 1
        %p349 = scmp.lt.s32.totalorder %s22, 3
        %s350 = scalar_select %p349, %s22, 3
        %p351 = scmp.lt.s32.totalorder %s23, 0
        %s352 = scalar_select %p351, %s23, 0
        %s353 = sadd.s32 %s352, %s350
        %s354 = smul.addr %s348, 4
        %s355 = sadd.s32 %s353, %s354
        %s356 = smul.addr %s355, 8
        %s357 = scalar_lea.vmem %s4, %s356
        %p358 = scmp.lt.s32.totalorder %s21, 1
        %s359 = scalar_select %p358, %s21, 1
        %p360 = scmp.lt.s32.totalorder %s23, 0
        %s361 = scalar_select %p360, %s23, 0
        %s362 = sadd.s32 %s361, %s359
        %s363 = smul.addr %s362, 8
        %s364 = scalar_lea.vmem %s0, %s363
        %p365 = scmp.lt.s32.totalorder %s21, 1
        %s366 = scalar_select %p365, %s21, 1
        %p367 = scmp.lt.s32.totalorder %s22, 3
        %s368 = scalar_select %p367, %s22, 3
        %p369 = scmp.lt.s32.totalorder %s23, 0
        %s370 = scalar_select %p369, %s23, 0
        %s371 = sadd.s32 %s370, %s368
        %s372 = smul.addr %s366, 4
        %s373 = sadd.s32 %s371, %s372
        %s374 = smul.addr %s373, 8
        %s375 = scalar_lea.vmem %s2, %s374
        %p376 = scmp.lt.s32.totalorder %s21, 1
        %s377 = scalar_select %p376, %s21, 1
        %p378 = scmp.lt.s32.totalorder %s22, 3
        %s379 = scalar_select %p378, %s22, 3
        %p380 = scmp.lt.s32.totalorder %s23, 0
        %s381 = scalar_select %p380, %s23, 0
        %s382 = sadd.s32 %s381, %s379
        %s383 = smul.addr %s377, 4
        %s384 = sadd.s32 %s382, %s383
        %s385 = smul.addr %s384, 8
        %s386 = scalar_lea.vmem %s3, %s385
        %p387 = scmp.lt.s32.totalorder %s21, 1
        %s388 = scalar_select %p387, %s21, 1
        %p389 = scmp.lt.s32.totalorder %s22, 3
        %s390 = scalar_select %p389, %s22, 3
        %p391 = scmp.lt.s32.totalorder %s23, 0
        %s392 = scalar_select %p391, %s23, 0
        %s393 = sadd.s32 %s392, %s390
        %s394 = smul.addr %s388, 4
        %s395 = sadd.s32 %s393, %s394
        %s396 = smul.addr %s395, 8
        %s397 = scalar_lea.vmem %s4, %s396
        %v398 = vld [vmem:[%s364] sm:$0xff]
        %v399 = vld [vmem:[%s300] sm:$0xff]
        %v400 = vld [vmem:[%s300 + $0x8] sm:$0xff]
        %v401 = vld [vmem:[%s300 + $0x10] sm:$0xff]
        %v402 = vld [vmem:[%s300 + $0x18] sm:$0xff]
        %vm403 = vcmask 261120
        %v405 = vsel %vm403, %v398, 0
        %407 = vmatpush.msra.mxu0 0.0
        %408 = vmatpush.msra.mxu0 0.0
        %409 = vmatpush.msra.mxu0 0.0
        %410 = vmatpush.msra.mxu0 0.0
        %411 = vmatpush.msra.mxu0 0.0
        %412 = vmatpush.msra.mxu0 0.0
        %413 = vmatpush.msra.mxu0 0.0
        %414 = vmatpush.msra.mxu0 0.0
        %415 = vmatpush.msra.mxu0 0.0
        %416 = vmatpush.msra.mxu0 0.0
        %417 = vmatpush.msra.mxu0 0.0
        %418 = vmatpush.msra.mxu0 0.0
        %419 = vmatpush.msra.mxu0 %v402
        %420 = vmatpush.msra.mxu0 %v401
        %421 = vmatpush.msra.mxu0 %v400
        %422 = vmatpush.msra.mxu0 %v399
        %423 = vmatmul.f32.gmra.mxu0 %v405
        %v424 = vpop.f32.mrf.mxu0
        %v425 = vadd.f32 0.0, %v424
        %426 = vdwg.mxu0
        %vm427 = vcmask 64512
        %428 = vst.msk [vmem:[%s375] sm:$0xff] %vm427, %v425
        %s429 = scalar_lea.vmem %s300, 32 [#allocation2]
        %v430 = vld [vmem:[%s429] sm:$0xff]
        %v431 = vld [vmem:[%s429 + $0x8] sm:$0xff]
        %v432 = vld [vmem:[%s429 + $0x10] sm:$0xff]
        %v433 = vld [vmem:[%s429 + $0x18] sm:$0xff]
        %434 = vmatpush.msra.mxu0 0.0
        %435 = vmatpush.msra.mxu0 0.0
        %436 = vmatpush.msra.mxu0 0.0
        %437 = vmatpush.msra.mxu0 0.0
        %438 = vmatpush.msra.mxu0 0.0
        %439 = vmatpush.msra.mxu0 0.0
        %440 = vmatpush.msra.mxu0 0.0
        %441 = vmatpush.msra.mxu0 0.0
        %442 = vmatpush.msra.mxu0 0.0
        %443 = vmatpush.msra.mxu0 0.0
        %444 = vmatpush.msra.mxu0 0.0
        %445 = vmatpush.msra.mxu0 0.0
        %446 = vmatpush.msra.mxu0 %v433
        %447 = vmatpush.msra.mxu0 %v432
        %448 = vmatpush.msra.mxu0 %v431
        %449 = vmatpush.msra.mxu0 %v430
        %450 = vmatmul.f32.gmra.mxu0 %v405
        %v451 = vpop.f32.mrf.mxu0
        %v452 = vadd.f32 0.0, %v451
        %453 = vdwg.mxu0
        %454 = vst.msk [vmem:[%s386] sm:$0xff] %vm427, %v452
        %s455 = scalar_lea.vmem %s300, 64 [#allocation2]
        %v456 = vld [vmem:[%s455] sm:$0xff]
        %v457 = vld [vmem:[%s455 + $0x8] sm:$0xff]
        %v458 = vld [vmem:[%s455 + $0x10] sm:$0xff]
        %v459 = vld [vmem:[%s455 + $0x18] sm:$0xff]
        %460 = vmatpush.msra.mxu0 0.0
        %461 = vmatpush.msra.mxu0 0.0
        %462 = vmatpush.msra.mxu0 0.0
        %463 = vmatpush.msra.mxu0 0.0
        %464 = vmatpush.msra.mxu0 0.0
        %465 = vmatpush.msra.mxu0 0.0
        %466 = vmatpush.msra.mxu0 0.0
        %467 = vmatpush.msra.mxu0 0.0
        %468 = vmatpush.msra.mxu0 0.0
        %469 = vmatpush.msra.mxu0 0.0
        %470 = vmatpush.msra.mxu0 0.0
        %471 = vmatpush.msra.mxu0 0.0
        %472 = vmatpush.msra.mxu0 %v459
        %473 = vmatpush.msra.mxu0 %v458
        %474 = vmatpush.msra.mxu0 %v457
        %475 = vmatpush.msra.mxu0 %v456
        %476 = vmatmul.f32.gmra.mxu0 %v405
        %v477 = vpop.f32.mrf.mxu0
        %v478 = vadd.f32 0.0, %v477
        %479 = vdwg.mxu0
        %480 = vst.msk [vmem:[%s397] sm:$0xff] %vm427, %v478
        %p481 = scmp.lt.s32.totalorder %s21, 1
        %s482 = scalar_select %p481, %s21, 1
        %p483 = scmp.lt.s32.totalorder %s22, 3
        %s484 = scalar_select %p483, %s22, 3
        %p485 = scmp.lt.s32.totalorder %s23, 0
        %s486 = scalar_select %p485, %s23, 0
        %s487 = sadd.s32 %s486, %s484
        %s488 = smul.addr %s482, 4
        %s489 = sadd.s32 %s487, %s488
        %s490 = smul.addr %s489, 8
        %s491 = scalar_lea.vmem %s2, %s490
        %p492 = scmp.lt.s32.totalorder %s21, 1
        %s493 = scalar_select %p492, %s21, 1
        %p494 = scmp.lt.s32.totalorder %s22, 3
        %s495 = scalar_select %p494, %s22, 3
        %p496 = scmp.lt.s32.totalorder %s23, 0
        %s497 = scalar_select %p496, %s23, 0
        %s498 = sadd.s32 %s497, %s495
        %s499 = smul.addr %s493, 4
        %s500 = sadd.s32 %s498, %s499
        %s501 = smul.addr %s500, 8
        %s502 = scalar_lea.vmem %s3, %s501
        %p503 = scmp.lt.s32.totalorder %s21, 1
        %s504 = scalar_select %p503, %s21, 1
        %p505 = scmp.lt.s32.totalorder %s22, 3
        %s506 = scalar_select %p505, %s22, 3
        %p507 = scmp.lt.s32.totalorder %s23, 0
        %s508 = scalar_select %p507, %s23, 0
        %s509 = sadd.s32 %s508, %s506
        %s510 = smul.addr %s504, 4
        %s511 = sadd.s32 %s509, %s510
        %s512 = smul.addr %s511, 8
        %s513 = scalar_lea.vmem %s4, %s512
        // Predicated region
        $region67: #{physics_informed_self_attention.3} parent=61 // pred_check
          %p514 = pneg %p111
        $region68: #{physics_informed_self_attention.3} parent=61 // pred_check_branch
          %516 = sbr.rel (%p514) target = $region70
        $region69: #{physics_informed_self_attention.3} parent=61 // pred_region
          _
        $region70: #{physics_informed_self_attention.3} parent=61 // pred_fallthru
          _
        // Predicated region
        $region71: #{physics_informed_self_attention.3} parent=61 // pred_check
          %p517 = pneg %p141
        $region72: #{physics_informed_self_attention.3} parent=61 // pred_check_branch
          %519 = sbr.rel (%p517) target = $region74
        $region73: #{physics_informed_self_attention.3} parent=61 // pred_region
          _
        $region74: #{physics_informed_self_attention.3} parent=61 // pred_fallthru
          _
        // Predicated region
        $region75: #{physics_informed_self_attention.3} parent=61 // pred_check
          %p520 = pneg %p171
        $region76: #{physics_informed_self_attention.3} parent=61 // pred_check_branch
          %522 = sbr.rel (%p520) target = $region78
        $region77: #{physics_informed_self_attention.3} parent=61 // pred_region
          _
        $region78: #{physics_informed_self_attention.3} parent=61 // pred_fallthru
          _
      $region62: #{physics_informed_self_attention.3} parent=5 // pred_fallthru
        _
      %p523 = scmp.le.s32.totalorder 2, %s11
      // Predicated region
      $region79: #{physics_informed_self_attention.3} parent=5 // pred_check
        %p524 = pneg %p523
      $region80: #{physics_informed_self_attention.3} parent=5 // pred_check_branch
        %526 = sbr.rel (%p524) target = $region82
      $region81: #{physics_informed_self_attention.3} parent=5 // pred_region
        %s527 = ssub.s32 %s11, 2
        // Predicated region
        $region83: #{physics_informed_self_attention.3} parent=81 // pred_check
          %p528 = pneg %p117
        $region84: #{physics_informed_self_attention.3} parent=81 // pred_check_branch
          %530 = sbr.rel (%p528) target = $region86
        $region85: #{physics_informed_self_attention.3} parent=81 // pred_region
          %p531 = scmp.lt.s32.totalorder %s24, 1
          %s532 = scalar_select %p531, %s24, 1
          %p533 = scmp.lt.s32.totalorder %s25, 3
          %s534 = scalar_select %p533, %s25, 3
          %p535 = scmp.lt.s32.totalorder %s26, 0
          %s536 = scalar_select %p535, %s26, 0
          %s537 = sadd.s32 %s536, %s534
          %s538 = smul.addr %s532, 4
          %s539 = sadd.s32 %s537, %s538
          %s540 = smul.addr %s539, 8
          %s541 = scalar_lea.vmem %s2, %s540
        $region86: #{physics_informed_self_attention.3} parent=81 // pred_fallthru
          _
        // Predicated region
        $region87: #{physics_informed_self_attention.3} parent=81 // pred_check
          %p542 = pneg %p147
        $region88: #{physics_informed_self_attention.3} parent=81 // pred_check_branch
          %544 = sbr.rel (%p542) target = $region90
        $region89: #{physics_informed_self_attention.3} parent=81 // pred_region
          %p545 = scmp.lt.s32.totalorder %s24, 1
          %s546 = scalar_select %p545, %s24, 1
          %p547 = scmp.lt.s32.totalorder %s25, 3
          %s548 = scalar_select %p547, %s25, 3
          %p549 = scmp.lt.s32.totalorder %s26, 0
          %s550 = scalar_select %p549, %s26, 0
          %s551 = sadd.s32 %s550, %s548
          %s552 = smul.addr %s546, 4
          %s553 = sadd.s32 %s551, %s552
          %s554 = smul.addr %s553, 8
          %s555 = scalar_lea.vmem %s3, %s554
        $region90: #{physics_informed_self_attention.3} parent=81 // pred_fallthru
          _
        // Predicated region
        $region91: #{physics_informed_self_attention.3} parent=81 // pred_check
          %p556 = pneg %p177
        $region92: #{physics_informed_self_attention.3} parent=81 // pred_check_branch
          %558 = sbr.rel (%p556) target = $region94
        $region93: #{physics_informed_self_attention.3} parent=81 // pred_region
          %p559 = scmp.lt.s32.totalorder %s24, 1
          %s560 = scalar_select %p559, %s24, 1
          %p561 = scmp.lt.s32.totalorder %s25, 3
          %s562 = scalar_select %p561, %s25, 3
          %p563 = scmp.lt.s32.totalorder %s26, 0
          %s564 = scalar_select %p563, %s26, 0
          %s565 = sadd.s32 %s564, %s562
          %s566 = smul.addr %s560, 4
          %s567 = sadd.s32 %s565, %s566
          %s568 = smul.addr %s567, 8
          %s569 = scalar_lea.vmem %s4, %s568
        $region94: #{physics_informed_self_attention.3} parent=81 // pred_fallthru
          _
      $region82: #{physics_informed_self_attention.3} parent=5 // pred_fallthru
        _
    $region6: #{physics_informed_self_attention.3} parent=1 // loop_footer
      %s15 = sadd.s32 1, %s11
    $region7: #{physics_informed_self_attention.3} parent=1 // loop_footer_branch
      %10 = sbr.rel target = $region3
    $region8: #{physics_informed_self_attention.3} parent=1 // loop_exit
      _

// kernel: physics_informed_self_attention.5
$region0: #{physics_informed_self_attention.5}
  #allocation0 [shape = 'u32[]', space=smem, size = 0x4, offset = 0x4, fixed_abs, tag = 'smem constant byte address 0x4 - core index']
  #allocation1 [shape = 'u32[72,128]{1,0:T(1,128)}', space=vmem, size = 0x9000, scoped, tag = 'internal scratch']
  #allocation2 [shape = 'f32[8,32]{1,0:T(8,128)}', space=vmem, size = 0x1000, scoped, tag = 'scratch operand']
  %s0 = inlined_call_operand.vmem [shape: f32[2,4,8,8], index: 0, kind: input, shape index: {}]
  %s1 = inlined_call_operand.vmem [shape: f32[4,8,32], index: 1, kind: input, shape index: {}]
  %s2 = inlined_call_operand.hbm [shape: f32[2,8,32], index: 2, kind: output, shape index: {}]
  %s3 = sld [smem:[#allocation0]]
  $region49: #{physics_informed_self_attention.5} parent=0
    _
  %s5 = ssub.s32 1, %s3
  %s6 = scalar_select 0, %s5, %s3
  $region1: #{physics_informed_self_attention.5} parent=0
    #allocation3 [shape = 'u8[8192]{0}', space=vmem, size = 0x2000, scoped, tag = 'output window, operand 0']
    #allocation4 [shape = 's32[2]{0}', space=sflag, size = 0x8, scoped, tag = 'scoped memory for physics_informed_self_attention.5']
    %7 = vsyncpa [#allocation4], 0
    %s8 = scalar_lea.sflag [#allocation4], 1
    %9 = vsyncpa %s8, 0
    loop: start=0, step=1, limit=10
    $region2: #{physics_informed_self_attention.5} parent=1 // loop_pre_header
      _
    $region3: #{physics_informed_self_attention.5} parent=1 // loop_header
      %s11 = sphi 0, %s15
      %p12 = scmp.ge.s32.totalorder %s11, 10
      %s18 = sphi 0, %s37
      %s19 = sphi 0, %s33
      %s20 = sphi 0, %s29
      %s21 = sphi 0, %s18
      %s22 = sphi 0, %s19
      %s23 = sphi 0, %s20
      %s24 = sphi 0, %s21
      %s25 = sphi 0, %s22
      %s26 = sphi 0, %s23
      %s44 = sphi 0, %s46
      %s47 = sphi 0, %s44
      %s48 = sphi 0, %s47
      %s64 = sphi 0, %s48
      %s70 = sphi 0, %s72
      %s73 = sphi 0, %s70
      %s74 = sphi 0, %s73
      %s90 = sphi 0, %s74
      %s98 = sphi 0, %s100
      %s101 = sphi 0, %s98
      %s102 = sphi 0, %s101
      %s118 = sphi 0, %s102
    $region4: #{physics_informed_self_attention.5} parent=1 // loop_header_branch
      %14 = sbr.rel (%p12) target = $region8
    $region5: #{physics_informed_self_attention.5} parent=1 // loop_body
      %s16 = ssub.s32 %s11, 1
      %s17 = ssub.s32 %s11, 2
      %s27 = sadd.s32 1, %s20
      %p28 = scmp.ge.s32.totalorder %s27, 4
      %s29 = scalar_select %p28, 0, %s27
      %s30 = sadd.s32 1, %s19
      %s31 = scalar_select %p28, %s30, %s19
      %p32 = scmp.ge.s32.totalorder %s31, 1
      %s33 = scalar_select %p32, 0, %s31
      %s34 = sadd.s32 1, %s18
      %s35 = scalar_select %p32, %s34, %s18
      %p36 = scmp.ge.s32.totalorder %s35, 2
      %s37 = scalar_select %p36, 0, %s35
      %s38 = ssub.s32 %s18, %s37
      %s39 = ssub.s32 %s20, %s29
      %s40 = sor.u32 %s38, %s39
      %s41 = ssub.s32 %s19, %s33
      %s42 = sor.u32 %s40, %s41
      %p43 = scmp.eq.s32.totalorder %s42, 0
      %s45 = sadd.s32 %s44, 1
      %s46 = scalar_select %p43, %s44, %s45
      %p49 = pneg %p43
      %p50 = scmp.eq.s32.totalorder %s11, 7
      %p51 = por %p49, %p50
      %p52 = scmp.ne.s32.totalorder %s44, %s47
      %p53 = scmp.eq.s32.totalorder %s11, 0
      %p54 = por %p52, %p53
      %p55 = scmp.ne.s32.totalorder %s44, %s47
      %p56 = scmp.eq.s32.totalorder %s16, 7
      %p57 = por %p55, %p56
      %p58 = scmp.ne.s32.totalorder %s47, %s48
      %p59 = scmp.eq.s32.totalorder %s16, 0
      %p60 = por %p58, %p59
      %p61 = scmp.ne.s32.totalorder %s47, %s48
      %p62 = scmp.eq.s32.totalorder %s17, 7
      %p63 = por %p61, %p62
      %p65 = scmp.ne.s32.totalorder %s48, %s64
      %p66 = scmp.eq.s32.totalorder %s17, 0
      %p67 = por %p65, %p66
      %s68 = ssub.s32 %s20, %s29
      %p69 = scmp.eq.s32.totalorder %s68, 0
      %s71 = sadd.s32 %s70, 1
      %s72 = scalar_select %p69, %s70, %s71
      %p75 = pneg %p69
      %p76 = scmp.eq.s32.totalorder %s11, 7
      %p77 = por %p75, %p76
      %p78 = scmp.ne.s32.totalorder %s70, %s73
      %p79 = scmp.eq.s32.totalorder %s11, 0
      %p80 = por %p78, %p79
      %p81 = scmp.ne.s32.totalorder %s70, %s73
      %p82 = scmp.eq.s32.totalorder %s16, 7
      %p83 = por %p81, %p82
      %p84 = scmp.ne.s32.totalorder %s73, %s74
      %p85 = scmp.eq.s32.totalorder %s16, 0
      %p86 = por %p84, %p85
      %p87 = scmp.ne.s32.totalorder %s73, %s74
      %p88 = scmp.eq.s32.totalorder %s17, 7
      %p89 = por %p87, %p88
      %p91 = scmp.ne.s32.totalorder %s74, %s90
      %p92 = scmp.eq.s32.totalorder %s17, 0
      %p93 = por %p91, %p92
      %s94 = ssub.s32 %s18, %s37
      %s95 = ssub.s32 %s19, %s33
      %s96 = sor.u32 %s94, %s95
      %p97 = scmp.eq.s32.totalorder %s96, 0
      %s99 = sadd.s32 %s98, 1
      %s100 = scalar_select %p97, %s98, %s99
      %p103 = pneg %p97
      %p104 = scmp.eq.s32.totalorder %s11, 7
      %p105 = por %p103, %p104
      %p106 = scmp.ne.s32.totalorder %s98, %s101
      %p107 = scmp.eq.s32.totalorder %s11, 0
      %p108 = por %p106, %p107
      %p109 = scmp.ne.s32.totalorder %s98, %s101
      %p110 = scmp.eq.s32.totalorder %s16, 7
      %p111 = por %p109, %p110
      %p112 = scmp.ne.s32.totalorder %s101, %s102
      %p113 = scmp.eq.s32.totalorder %s16, 0
      %p114 = por %p112, %p113
      %p115 = scmp.ne.s32.totalorder %s101, %s102
      %p116 = scmp.eq.s32.totalorder %s17, 7
      %p117 = por %p115, %p116
      %p119 = scmp.ne.s32.totalorder %s102, %s118
      %p120 = scmp.eq.s32.totalorder %s17, 0
      %p121 = por %p119, %p120
      %p122 = scmp.le.s32.totalorder 1, %s11
      %p123 = scmp.lt.s32.totalorder %s11, 9
      %p124 = pnand %p122, %p123
      %p125 = pneg %p124
      // Predicated region
      $region9: #{physics_informed_self_attention.5} parent=5 // pred_check
        _
      $region10: #{physics_informed_self_attention.5} parent=5 // pred_check_branch
        %127 = sbr.rel (%p124) target = $region12
      $region11: #{physics_informed_self_attention.5} parent=5 // pred_region
        %s128 = ssub.s32 %s11, 1
      $region12: #{physics_informed_self_attention.5} parent=5 // pred_fallthru
        _
      %p129 = scmp.lt.s32.totalorder %s11, 8
      // Predicated region
      $region13: #{physics_informed_self_attention.5} parent=5 // pred_check
        %p130 = pneg %p129
      $region14: #{physics_informed_self_attention.5} parent=5 // pred_check_branch
        %132 = sbr.rel (%p130) target = $region16
      $region15: #{physics_informed_self_attention.5} parent=5 // pred_region
        // Predicated region
        $region17: #{physics_informed_self_attention.5} parent=15 // pred_check
          %p133 = pneg %p54
        $region18: #{physics_informed_self_attention.5} parent=15 // pred_check_branch
          %135 = sbr.rel (%p133) target = $region20
        $region19: #{physics_informed_self_attention.5} parent=15 // pred_region
          %p136 = scmp.lt.s32.totalorder %s18, 1
          %s137 = scalar_select %p136, %s18, 1
          %p138 = scmp.lt.s32.totalorder %s20, 3
          %s139 = scalar_select %p138, %s20, 3
          %p140 = scmp.lt.s32.totalorder %s19, 0
          %s141 = scalar_select %p140, %s19, 0
          %s142 = sadd.s32 %s141, %s139
          %s143 = smul.addr %s137, 4
          %s144 = sadd.s32 %s142, %s143
          %s145 = smul.addr %s144, 8
          %s146 = scalar_lea.vmem %s0, %s145
        $region20: #{physics_informed_self_attention.5} parent=15 // pred_fallthru
          _
        // Predicated region
        $region21: #{physics_informed_self_attention.5} parent=15 // pred_check
          %p147 = pneg %p80
        $region22: #{physics_informed_self_attention.5} parent=15 // pred_check_branch
          %149 = sbr.rel (%p147) target = $region24
        $region23: #{physics_informed_self_attention.5} parent=15 // pred_region
          %p150 = scmp.lt.s32.totalorder %s20, 3
          %s151 = scalar_select %p150, %s20, 3
          %s152 = smul.addr %s151, 8
          %s153 = scalar_lea.vmem %s1, %s152
        $region24: #{physics_informed_self_attention.5} parent=15 // pred_fallthru
          _
      $region16: #{physics_informed_self_attention.5} parent=5 // pred_fallthru
        _
      %p154 = scmp.le.s32.totalorder 1, %s11
      %p155 = scmp.lt.s32.totalorder %s11, 9
      %p156 = pnand %p154, %p155
      %p157 = pneg %p156
      // Predicated region
      $region25: #{physics_informed_self_attention.5} parent=5 // pred_check
        _
      $region26: #{physics_informed_self_attention.5} parent=5 // pred_check_branch
        %159 = sbr.rel (%p156) target = $region28
      $region27: #{physics_informed_self_attention.5} parent=5 // pred_region
        %s160 = ssub.s32 %s11, 1
        %p161 = scmp.lt.s32.totalorder %s21, 1
        %s162 = scalar_select %p161, %s21, 1
        %p163 = scmp.lt.s32.totalorder %s23, 3
        %s164 = scalar_select %p163, %s23, 3
        %p165 = scmp.lt.s32.totalorder %s22, 0
        %s166 = scalar_select %p165, %s22, 0
        %s167 = sadd.s32 %s166, %s164
        %s168 = smul.addr %s162, 4
        %s169 = sadd.s32 %s167, %s168
        %s170 = smul.addr %s169, 8
        %s171 = scalar_lea.vmem %s0, %s170
        %p172 = pneg %p60
        %p173 = pneg %p57
        %p174 = scmp.lt.s32.totalorder %s23, 3
        %s175 = scalar_select %p174, %s23, 3
        %s176 = smul.addr %s175, 8
        %s177 = scalar_lea.vmem %s1, %s176
        %p178 = pneg %p86
        %p179 = pneg %p83
        %p180 = pneg %p114
        %p181 = pneg %p111
        %s182 = sand.u32 %s101, 1
        %s183 = scalar_lea.sflag [#allocation4], %s182
        %s184 = sand.u32 %s101, 1
        %s185 = smul.addr %s184, 8
        %s186 = scalar_lea.vmem [#allocation3], %s185
        %p187 = scmp.lt.s32.totalorder %s21, 1
        %s188 = scalar_select %p187, %s21, 1
        %p189 = scmp.lt.s32.totalorder %s23, 3
        %s190 = scalar_select %p189, %s23, 3
        %p191 = scmp.lt.s32.totalorder %s22, 0
        %s192 = scalar_select %p191, %s22, 0
        %s193 = sadd.s32 %s192, %s190
        %s194 = smul.addr %s188, 4
        %s195 = sadd.s32 %s193, %s194
        %s196 = smul.addr %s195, 8
        %s197 = scalar_lea.vmem %s0, %s196
        %p198 = scmp.lt.s32.totalorder %s23, 3
        %s199 = scalar_select %p198, %s23, 3
        %s200 = smul.addr %s199, 8
        %s201 = scalar_lea.vmem %s1, %s200
        %p202 = scmp.eq.s32.totalorder %s23, 0
        // Predicated region
        $region29: #{physics_informed_self_attention.5} parent=27 // pred_check
          %p203 = pneg %p202
        $region30: #{physics_informed_self_attention.5} parent=27 // pred_check_branch
          %205 = sbr.rel (%p203) target = $region32
        $region31: #{physics_informed_self_attention.5} parent=27 // pred_region
          %vm206 = vcmask 261120
          %207 = vst.msk [vmem:[#allocation2] sm:$0xff] %vm206, 0.0
        $region32: #{physics_informed_self_attention.5} parent=27 // pred_fallthru
          _
        %v208 = vld [vmem:[#allocation2] sm:$0xff]
        %v209 = vld [vmem:[%s197] sm:$0xff]
        %v210 = vld [vmem:[%s201] sm:$0xff]
        %vm211 = vcmask 64512
        %v213 = vsel %vm211, %v209, 0
        %215 = vmatpush.msra.mxu0 0.0
        %216 = vmatpush.msra.mxu0 0.0
        %217 = vmatpush.msra.mxu0 0.0
        %218 = vmatpush.msra.mxu0 0.0
        %219 = vmatpush.msra.mxu0 0.0
        %220 = vmatpush.msra.mxu0 0.0
        %221 = vmatpush.msra.mxu0 0.0
        %222 = vmatpush.msra.mxu0 0.0
        %223 = vmatpush.msra.mxu0 0.0
        %224 = vmatpush.msra.mxu0 0.0
        %225 = vmatpush.msra.mxu0 0.0
        %226 = vmatpush.msra.mxu0 0.0
        %227 = vmatpush.msra.mxu0 0.0
        %228 = vmatpush.msra.mxu0 0.0
        %229 = vmatpush.msra.mxu0 0.0
        %230 = vmatpush.msra.mxu0 %v210
        %231 = vmatmul.f32.gmra.mxu0 %v213
        %v232 = vpop.f32.mrf.mxu0
        %v233 = vadd.f32 0.0, %v232
        %234 = vdwg.mxu0
        %v235 = vadd.f32 %v208, %v233
        %vm236 = vcmask 261120
        %237 = vst.msk [vmem:[#allocation2] sm:$0xff] %vm236, %v235
        %p238 = scmp.eq.s32.totalorder %s23, 3
        // Predicated region
        $region33: #{physics_informed_self_attention.5} parent=27 // pred_check
          %p239 = pneg %p238
        $region34: #{physics_informed_self_attention.5} parent=27 // pred_check_branch
          %241 = sbr.rel (%p239) target = $region36
        $region35: #{physics_informed_self_attention.5} parent=27 // pred_region
          %v242 = vld [vmem:[#allocation2] sm:$0xff]
          %243 = vst.msk [vmem:[%s186] sm:$0xff] %vm236, %v242
        $region36: #{physics_informed_self_attention.5} parent=27 // pred_fallthru
          _
        %s244 = sand.u32 %s101, 1
        %s245 = scalar_lea.sflag [#allocation4], %s244
        %s246 = sand.u32 %s101, 1
        %s247 = smul.addr %s246, 8
        %s248 = scalar_lea.vmem [#allocation3], %s247
        // Predicated region
        $region37: #{physics_informed_self_attention.5} parent=27 // pred_check
          %p249 = pneg %p111
        $region38: #{physics_informed_self_attention.5} parent=27 // pred_check_branch
          %251 = sbr.rel (%p249) target = $region40
        $region39: #{physics_informed_self_attention.5} parent=27 // pred_region
          %253 = vsyncadd %s245, 0
          %s254 = sadd.s32 %s22, %s21
          %s255 = smul.addr %s254, 8
          %s256 = scalar_lea.hbm %s2, %s255
          %s258 = sshll.u32 %s248, 4
          %s259 = int_to_ptr.vmem [resolvable:$true] %s258
          %s260 = sshll.u32 %s256, 4
          %s261 = int_to_ptr.hbm [resolvable:$true] %s260
          %263 = dma.vmem_to_hbm [thread:$0]  %s259, 128, %s261, %s245
        $region40: #{physics_informed_self_attention.5} parent=27 // pred_fallthru
          _
      $region28: #{physics_informed_self_attention.5} parent=5 // pred_fallthru
        _
      %p264 = scmp.le.s32.totalorder 2, %s11
      // Predicated region
      $region41: #{physics_informed_self_attention.5} parent=5 // pred_check
        %p265 = pneg %p264
      $region42: #{physics_informed_self_attention.5} parent=5 // pred_check_branch
        %267 = sbr.rel (%p265) target = $region44
      $region43: #{physics_informed_self_attention.5} parent=5 // pred_region
        %s268 = ssub.s32 %s11, 2
        // Predicated region
        $region45: #{physics_informed_self_attention.5} parent=43 // pred_check
          %p269 = pneg %p117
        $region46: #{physics_informed_self_attention.5} parent=43 // pred_check_branch
          %271 = sbr.rel (%p269) target = $region48
        $region47: #{physics_informed_self_attention.5} parent=43 // pred_region
          %s272 = sand.u32 %s102, 1
          %s273 = scalar_lea.sflag [#allocation4], %s272
          %s274 = sand.u32 %s102, 1
          %s275 = smul.addr %s274, 8
          %s276 = scalar_lea.vmem [#allocation3], %s275
          %278 = dma.done %s273, 128
        $region48: #{physics_informed_self_attention.5} parent=43 // pred_fallthru
          _
      $region44: #{physics_informed_self_attention.5} parent=5 // pred_fallthru
        _
    $region6: #{physics_informed_self_attention.5} parent=1 // loop_footer
      %s15 = sadd.s32 1, %s11
    $region7: #{physics_informed_self_attention.5} parent=1 // loop_footer_branch
      %10 = sbr.rel target = $region3
    $region8: #{physics_informed_self_attention.5} parent=1 // loop_exit
      _
    %279 = vsyncpa [#allocation4], 1
    %s280 = scalar_lea.sflag [#allocation4], 1
    %281 = vsyncpa %s280, 1

// kernel: physics_informed_self_attention.4
$region0: #{physics_informed_self_attention.4}
  #allocation0 [shape = 'u32[]', space=smem, size = 0x4, offset = 0x4, fixed_abs, tag = 'smem constant byte address 0x4 - core index']
  #allocation1 [shape = 'u32[72,128]{1,0:T(1,128)}', space=vmem, size = 0x9000, scoped, tag = 'internal scratch']
  #allocation2 [shape = 'f32[8,1]{1,0:T(8,128)}', space=vmem, size = 0x1000, scoped, tag = 'scratch operand']
  #allocation3 [shape = 'f32[8,1]{1,0:T(8,128)}', space=vmem, size = 0x1000, scoped, tag = 'scratch operand']
  #allocation4 [shape = 'f32[8,8]{1,0:T(8,128)}', space=vmem, size = 0x1000, scoped, tag = 'scratch operand']
  %s0 = inlined_call_operand.vmem [shape: f32[2,4,8,8], index: 0, kind: input, shape index: {}]
  %s1 = inlined_call_operand.vmem [shape: f32[2,4,8,8], index: 1, kind: input, shape index: {}]
  %s2 = inlined_call_operand.vmem [shape: f32[2,4,8,8], index: 2, kind: input, shape index: {}]
  %s3 = inlined_call_operand.vmem [shape: f32[2,4,8,8], index: 3, kind: output, shape index: {}]
  %s4 = sld [smem:[#allocation0]]
  $region53: #{physics_informed_self_attention.4} parent=0
    _
  %s6 = ssub.s32 1, %s4
  %s7 = scalar_select 0, %s6, %s4
  loop: start=0, step=1, limit=10
  $region2: #{physics_informed_self_attention.4} parent=0 // loop_pre_header
    _
  $region3: #{physics_informed_self_attention.4} parent=0 // loop_header
    %s9 = sphi 0, %s13
    %p10 = scmp.ge.s32.totalorder %s9, 10
    %s16 = sphi 0, %s42
    %s17 = sphi 0, %s38
    %s18 = sphi 0, %s34
    %s19 = sphi 0, %s30
    %s20 = sphi 0, %s16
    %s21 = sphi 0, %s17
    %s22 = sphi 0, %s18
    %s23 = sphi 0, %s19
    %s24 = sphi 0, %s20
    %s25 = sphi 0, %s21
    %s26 = sphi 0, %s22
    %s27 = sphi 0, %s23
    %s49 = sphi 0, %s51
    %s52 = sphi 0, %s49
    %s53 = sphi 0, %s52
    %s69 = sphi 0, %s53
    %s79 = sphi 0, %s81
    %s82 = sphi 0, %s79
    %s83 = sphi 0, %s82
    %s99 = sphi 0, %s83
    %s109 = sphi 0, %s111
    %s112 = sphi 0, %s109
    %s113 = sphi 0, %s112
    %s129 = sphi 0, %s113
    %s139 = sphi 0, %s141
    %s142 = sphi 0, %s139
    %s143 = sphi 0, %s142
    %s159 = sphi 0, %s143
  $region4: #{physics_informed_self_attention.4} parent=0 // loop_header_branch
    %12 = sbr.rel (%p10) target = $region8
  $region5: #{physics_informed_self_attention.4} parent=0 // loop_body
    %s14 = ssub.s32 %s9, 1
    %s15 = ssub.s32 %s9, 2
    %s28 = sadd.s32 1, %s19
    %p29 = scmp.ge.s32.totalorder %s28, 1
    %s30 = scalar_select %p29, 0, %s28
    %s31 = sadd.s32 1, %s18
    %s32 = scalar_select %p29, %s31, %s18
    %p33 = scmp.ge.s32.totalorder %s32, 1
    %s34 = scalar_select %p33, 0, %s32
    %s35 = sadd.s32 1, %s17
    %s36 = scalar_select %p33, %s35, %s17
    %p37 = scmp.ge.s32.totalorder %s36, 4
    %s38 = scalar_select %p37, 0, %s36
    %s39 = sadd.s32 1, %s16
    %s40 = scalar_select %p37, %s39, %s16
    %p41 = scmp.ge.s32.totalorder %s40, 2
    %s42 = scalar_select %p41, 0, %s40
    %s43 = ssub.s32 %s16, %s42
    %s44 = ssub.s32 %s17, %s38
    %s45 = sor.u32 %s43, %s44
    %s46 = ssub.s32 %s18, %s34
    %s47 = sor.u32 %s45, %s46
    %p48 = scmp.eq.s32.totalorder %s47, 0
    %s50 = sadd.s32 %s49, 1
    %s51 = scalar_select %p48, %s49, %s50
    %p54 = pneg %p48
    %p55 = scmp.eq.s32.totalorder %s9, 7
    %p56 = por %p54, %p55
    %p57 = scmp.ne.s32.totalorder %s49, %s52
    %p58 = scmp.eq.s32.totalorder %s9, 0
    %p59 = por %p57, %p58
    %p60 = scmp.ne.s32.totalorder %s49, %s52
    %p61 = scmp.eq.s32.totalorder %s14, 7
    %p62 = por %p60, %p61
    %p63 = scmp.ne.s32.totalorder %s52, %s53
    %p64 = scmp.eq.s32.totalorder %s14, 0
    %p65 = por %p63, %p64
    %p66 = scmp.ne.s32.totalorder %s52, %s53
    %p67 = scmp.eq.s32.totalorder %s15, 7
    %p68 = por %p66, %p67
    %p70 = scmp.ne.s32.totalorder %s53, %s69
    %p71 = scmp.eq.s32.totalorder %s15, 0
    %p72 = por %p70, %p71
    %s73 = ssub.s32 %s16, %s42
    %s74 = ssub.s32 %s17, %s38
    %s75 = sor.u32 %s73, %s74
    %s76 = ssub.s32 %s19, %s30
    %s77 = sor.u32 %s75, %s76
    %p78 = scmp.eq.s32.totalorder %s77, 0
    %s80 = sadd.s32 %s79, 1
    %s81 = scalar_select %p78, %s79, %s80
    %p84 = pneg %p78
    %p85 = scmp.eq.s32.totalorder %s9, 7
    %p86 = por %p84, %p85
    %p87 = scmp.ne.s32.totalorder %s79, %s82
    %p88 = scmp.eq.s32.totalorder %s9, 0
    %p89 = por %p87, %p88
    %p90 = scmp.ne.s32.totalorder %s79, %s82
    %p91 = scmp.eq.s32.totalorder %s14, 7
    %p92 = por %p90, %p91
    %p93 = scmp.ne.s32.totalorder %s82, %s83
    %p94 = scmp.eq.s32.totalorder %s14, 0
    %p95 = por %p93, %p94
    %p96 = scmp.ne.s32.totalorder %s82, %s83
    %p97 = scmp.eq.s32.totalorder %s15, 7
    %p98 = por %p96, %p97
    %p100 = scmp.ne.s32.totalorder %s83, %s99
    %p101 = scmp.eq.s32.totalorder %s15, 0
    %p102 = por %p100, %p101
    %s103 = ssub.s32 %s16, %s42
    %s104 = ssub.s32 %s17, %s38
    %s105 = sor.u32 %s103, %s104
    %s106 = ssub.s32 %s19, %s30
    %s107 = sor.u32 %s105, %s106
    %p108 = scmp.eq.s32.totalorder %s107, 0
    %s110 = sadd.s32 %s109, 1
    %s111 = scalar_select %p108, %s109, %s110
    %p114 = pneg %p108
    %p115 = scmp.eq.s32.totalorder %s9, 7
    %p116 = por %p114, %p115
    %p117 = scmp.ne.s32.totalorder %s109, %s112
    %p118 = scmp.eq.s32.totalorder %s9, 0
    %p119 = por %p117, %p118
    %p120 = scmp.ne.s32.totalorder %s109, %s112
    %p121 = scmp.eq.s32.totalorder %s14, 7
    %p122 = por %p120, %p121
    %p123 = scmp.ne.s32.totalorder %s112, %s113
    %p124 = scmp.eq.s32.totalorder %s14, 0
    %p125 = por %p123, %p124
    %p126 = scmp.ne.s32.totalorder %s112, %s113
    %p127 = scmp.eq.s32.totalorder %s15, 7
    %p128 = por %p126, %p127
    %p130 = scmp.ne.s32.totalorder %s113, %s129
    %p131 = scmp.eq.s32.totalorder %s15, 0
    %p132 = por %p130, %p131
    %s133 = ssub.s32 %s16, %s42
    %s134 = ssub.s32 %s17, %s38
    %s135 = sor.u32 %s133, %s134
    %s136 = ssub.s32 %s18, %s34
    %s137 = sor.u32 %s135, %s136
    %p138 = scmp.eq.s32.totalorder %s137, 0
    %s140 = sadd.s32 %s139, 1
    %s141 = scalar_select %p138, %s139, %s140
    %p144 = pneg %p138
    %p145 = scmp.eq.s32.totalorder %s9, 7
    %p146 = por %p144, %p145
    %p147 = scmp.ne.s32.totalorder %s139, %s142
    %p148 = scmp.eq.s32.totalorder %s9, 0
    %p149 = por %p147, %p148
    %p150 = scmp.ne.s32.totalorder %s139, %s142
    %p151 = scmp.eq.s32.totalorder %s14, 7
    %p152 = por %p150, %p151
    %p153 = scmp.ne.s32.totalorder %s142, %s143
    %p154 = scmp.eq.s32.totalorder %s14, 0
    %p155 = por %p153, %p154
    %p156 = scmp.ne.s32.totalorder %s142, %s143
    %p157 = scmp.eq.s32.totalorder %s15, 7
    %p158 = por %p156, %p157
    %p160 = scmp.ne.s32.totalorder %s143, %s159
    %p161 = scmp.eq.s32.totalorder %s15, 0
    %p162 = por %p160, %p161
    %p163 = scmp.le.s32.totalorder 1, %s9
    %p164 = scmp.lt.s32.totalorder %s9, 9
    %p165 = pnand %p163, %p164
    %p166 = pneg %p165
    // Predicated region
    $region9: #{physics_informed_self_attention.4} parent=5 // pred_check
      _
    $region10: #{physics_informed_self_attention.4} parent=5 // pred_check_branch
      %168 = sbr.rel (%p165) target = $region12
    $region11: #{physics_informed_self_attention.4} parent=5 // pred_region
      %s169 = ssub.s32 %s9, 1
    $region12: #{physics_informed_self_attention.4} parent=5 // pred_fallthru
      _
    %p170 = scmp.lt.s32.totalorder %s9, 8
    // Predicated region
    $region13: #{physics_informed_self_attention.4} parent=5 // pred_check
      %p171 = pneg %p170
    $region14: #{physics_informed_self_attention.4} parent=5 // pred_check_branch
      %173 = sbr.rel (%p171) target = $region16
    $region15: #{physics_informed_self_attention.4} parent=5 // pred_region
      // Predicated region
      $region17: #{physics_informed_self_attention.4} parent=15 // pred_check
        %p174 = pneg %p59
      $region18: #{physics_informed_self_attention.4} parent=15 // pred_check_branch
        %176 = sbr.rel (%p174) target = $region20
      $region19: #{physics_informed_self_attention.4} parent=15 // pred_region
        %p177 = scmp.lt.s32.totalorder %s16, 1
        %s178 = scalar_select %p177, %s16, 1
        %p179 = scmp.lt.s32.totalorder %s17, 3
        %s180 = scalar_select %p179, %s17, 3
        %p181 = scmp.lt.s32.totalorder %s18, 0
        %s182 = scalar_select %p181, %s18, 0
        %s183 = sadd.s32 %s182, %s180
        %s184 = smul.addr %s178, 4
        %s185 = sadd.s32 %s183, %s184
        %s186 = smul.addr %s185, 8
        %s187 = scalar_lea.vmem %s0, %s186
      $region20: #{physics_informed_self_attention.4} parent=15 // pred_fallthru
        _
      // Predicated region
      $region21: #{physics_informed_self_attention.4} parent=15 // pred_check
        %p188 = pneg %p89
      $region22: #{physics_informed_self_attention.4} parent=15 // pred_check_branch
        %190 = sbr.rel (%p188) target = $region24
      $region23: #{physics_informed_self_attention.4} parent=15 // pred_region
        %p191 = scmp.lt.s32.totalorder %s16, 1
        %s192 = scalar_select %p191, %s16, 1
        %p193 = scmp.lt.s32.totalorder %s17, 3
        %s194 = scalar_select %p193, %s17, 3
        %p195 = scmp.lt.s32.totalorder %s19, 0
        %s196 = scalar_select %p195, %s19, 0
        %s197 = sadd.s32 %s196, %s194
        %s198 = smul.addr %s192, 4
        %s199 = sadd.s32 %s197, %s198
        %s200 = smul.addr %s199, 8
        %s201 = scalar_lea.vmem %s1, %s200
      $region24: #{physics_informed_self_attention.4} parent=15 // pred_fallthru
        _
      // Predicated region
      $region25: #{physics_informed_self_attention.4} parent=15 // pred_check
        %p202 = pneg %p119
      $region26: #{physics_informed_self_attention.4} parent=15 // pred_check_branch
        %204 = sbr.rel (%p202) target = $region28
      $region27: #{physics_informed_self_attention.4} parent=15 // pred_region
        %p205 = scmp.lt.s32.totalorder %s16, 1
        %s206 = scalar_select %p205, %s16, 1
        %p207 = scmp.lt.s32.totalorder %s17, 3
        %s208 = scalar_select %p207, %s17, 3
        %p209 = scmp.lt.s32.totalorder %s19, 0
        %s210 = scalar_select %p209, %s19, 0
        %s211 = sadd.s32 %s210, %s208
        %s212 = smul.addr %s206, 4
        %s213 = sadd.s32 %s211, %s212
        %s214 = smul.addr %s213, 8
        %s215 = scalar_lea.vmem %s2, %s214
      $region28: #{physics_informed_self_attention.4} parent=15 // pred_fallthru
        _
    $region16: #{physics_informed_self_attention.4} parent=5 // pred_fallthru
      _
    %p216 = scmp.le.s32.totalorder 1, %s9
    %p217 = scmp.lt.s32.totalorder %s9, 9
    %p218 = pnand %p216, %p217
    %p219 = pneg %p218
    // Predicated region
    $region29: #{physics_informed_self_attention.4} parent=5 // pred_check
      _
    $region30: #{physics_informed_self_attention.4} parent=5 // pred_check_branch
      %221 = sbr.rel (%p218) target = $region32
    $region31: #{physics_informed_self_attention.4} parent=5 // pred_region
      %s222 = ssub.s32 %s9, 1
      %p223 = scmp.lt.s32.totalorder %s20, 1
      %s224 = scalar_select %p223, %s20, 1
      %p225 = scmp.lt.s32.totalorder %s21, 3
      %s226 = scalar_select %p225, %s21, 3
      %p227 = scmp.lt.s32.totalorder %s22, 0
      %s228 = scalar_select %p227, %s22, 0
      %s229 = sadd.s32 %s228, %s226
      %s230 = smul.addr %s224, 4
      %s231 = sadd.s32 %s229, %s230
      %s232 = smul.addr %s231, 8
      %s233 = scalar_lea.vmem %s0, %s232
      %p234 = pneg %p65
      %p235 = pneg %p62
      %p236 = scmp.lt.s32.totalorder %s20, 1
      %s237 = scalar_select %p236, %s20, 1
      %p238 = scmp.lt.s32.totalorder %s21, 3
      %s239 = scalar_select %p238, %s21, 3
      %p240 = scmp.lt.s32.totalorder %s23, 0
      %s241 = scalar_select %p240, %s23, 0
      %s242 = sadd.s32 %s241, %s239
      %s243 = smul.addr %s237, 4
      %s244 = sadd.s32 %s242, %s243
      %s245 = smul.addr %s244, 8
      %s246 = scalar_lea.vmem %s1, %s245
      %p247 = pneg %p95
      %p248 = pneg %p92
      %p249 = scmp.lt.s32.totalorder %s20, 1
      %s250 = scalar_select %p249, %s20, 1
      %p251 = scmp.lt.s32.totalorder %s21, 3
      %s252 = scalar_select %p251, %s21, 3
      %p253 = scmp.lt.s32.totalorder %s23, 0
      %s254 = scalar_select %p253, %s23, 0
      %s255 = sadd.s32 %s254, %s252
      %s256 = smul.addr %s250, 4
      %s257 = sadd.s32 %s255, %s256
      %s258 = smul.addr %s257, 8
      %s259 = scalar_lea.vmem %s2, %s258
      %p260 = pneg %p125
      %p261 = pneg %p122
      %p262 = pneg %p155
      %p263 = pneg %p152
      %p264 = scmp.lt.s32.totalorder %s20, 1
      %s265 = scalar_select %p264, %s20, 1
      %p266 = scmp.lt.s32.totalorder %s21, 3
      %s267 = scalar_select %p266, %s21, 3
      %p268 = scmp.lt.s32.totalorder %s22, 0
      %s269 = scalar_select %p268, %s22, 0
      %s270 = sadd.s32 %s269, %s267
      %s271 = smul.addr %s265, 4
      %s272 = sadd.s32 %s270, %s271
      %s273 = smul.addr %s272, 8
      %s274 = scalar_lea.vmem %s3, %s273
      %p275 = scmp.lt.s32.totalorder %s20, 1
      %s276 = scalar_select %p275, %s20, 1
      %p277 = scmp.lt.s32.totalorder %s21, 3
      %s278 = scalar_select %p277, %s21, 3
      %p279 = scmp.lt.s32.totalorder %s22, 0
      %s280 = scalar_select %p279, %s22, 0
      %s281 = sadd.s32 %s280, %s278
      %s282 = smul.addr %s276, 4
      %s283 = sadd.s32 %s281, %s282
      %s284 = smul.addr %s283, 8
      %s285 = scalar_lea.vmem %s0, %s284
      %p286 = scmp.lt.s32.totalorder %s20, 1
      %s287 = scalar_select %p286, %s20, 1
      %p288 = scmp.lt.s32.totalorder %s21, 3
      %s289 = scalar_select %p288, %s21, 3
      %p290 = scmp.lt.s32.totalorder %s23, 0
      %s291 = scalar_select %p290, %s23, 0
      %s292 = sadd.s32 %s291, %s289
      %s293 = smul.addr %s287, 4
      %s294 = sadd.s32 %s292, %s293
      %s295 = smul.addr %s294, 8
      %s296 = scalar_lea.vmem %s1, %s295
      %p297 = scmp.lt.s32.totalorder %s20, 1
      %s298 = scalar_select %p297, %s20, 1
      %p299 = scmp.lt.s32.totalorder %s21, 3
      %s300 = scalar_select %p299, %s21, 3
      %p301 = scmp.lt.s32.totalorder %s23, 0
      %s302 = scalar_select %p301, %s23, 0
      %s303 = sadd.s32 %s302, %s300
      %s304 = smul.addr %s298, 4
      %s305 = sadd.s32 %s303, %s304
      %s306 = smul.addr %s305, 8
      %s307 = scalar_lea.vmem %s2, %s306
      %p308 = scmp.lt.s32.totalorder %s20, 1
      %s309 = scalar_select %p308, %s20, 1
      %p310 = scmp.lt.s32.totalorder %s21, 3
      %s311 = scalar_select %p310, %s21, 3
      %p312 = scmp.lt.s32.totalorder %s22, 0
      %s313 = scalar_select %p312, %s22, 0
      %s314 = sadd.s32 %s313, %s311
      %s315 = smul.addr %s309, 4
      %s316 = sadd.s32 %s314, %s315
      %s317 = smul.addr %s316, 8
      %s318 = scalar_lea.vmem %s3, %s317
      %p319 = scmp.eq.s32.totalorder %s23, 0
      // Predicated region
      $region33: #{physics_informed_self_attention.4} parent=31 // pred_check
        %p320 = pneg %p319
      $region34: #{physics_informed_self_attention.4} parent=31 // pred_check_branch
        %322 = sbr.rel (%p320) target = $region36
      $region35: #{physics_informed_self_attention.4} parent=31 // pred_region
        %vm323 = vcmask 7168
        %324 = vst.msk [vmem:[#allocation2] sm:$0xff] %vm323, -1e+30
        %325 = vst.msk [vmem:[#allocation3] sm:$0xff] %vm323, 0.0
        %vm326 = vcmask 64512
        %327 = vst.msk [vmem:[#allocation4] sm:$0xff] %vm326, 0.0
      $region36: #{physics_informed_self_attention.4} parent=31 // pred_fallthru
        _
      %v328 = vld [vmem:[%s285] sm:$0xff]
      %v329 = vld [vmem:[%s296] sm:$0xff]
      %vm330 = vcmask 64512
      %v332 = vsel %vm330, %v328, 0
      %v335 = vsel %vm330, %v329, 0
      %337 = vmatpush.xpose.msra.mxu0 0.0
      %338 = vmatpush.xpose.msra.mxu0 0.0
      %339 = vmatpush.xpose.msra.mxu0 0.0
      %340 = vmatpush.xpose.msra.mxu0 0.0
      %341 = vmatpush.xpose.msra.mxu0 0.0
      %342 = vmatpush.xpose.msra.mxu0 0.0
      %343 = vmatpush.xpose.msra.mxu0 0.0
      %344 = vmatpush.xpose.msra.mxu0 0.0
      %345 = vmatpush.xpose.msra.mxu0 0.0
      %346 = vmatpush.xpose.msra.mxu0 0.0
      %347 = vmatpush.xpose.msra.mxu0 0.0
      %348 = vmatpush.xpose.msra.mxu0 0.0
      %349 = vmatpush.xpose.msra.mxu0 0.0
      %350 = vmatpush.xpose.msra.mxu0 0.0
      %351 = vmatpush.xpose.msra.mxu0 0.0
      %352 = vmatpush.xpose.msra.mxu0 %v335
      %353 = vmatmul.f32.gmra.mxu0 %v332
      %v354 = vpop.f32.mrf.mxu0
      %v355 = vadd.f32 0.0, %v354
      %356 = vdwg.mxu0
      %v357 = vld [vmem:[#allocation2] sm:$0xff]
      %v358 = vsel %vm330, %v355, -inf
      %359 = vmax.xlane.f32.xlu0 %v358
      %v360 = vpop.xlane.xlu0 %359
      %v361 = vmax.f32 %v357, %v360
      %v362 = vsub.f32 %v357, %v361
      %v363 = vmul.f32 %v362, 1.442695
      %v364 = vpow.pop %v363
      %366 = vset.pattern.permute.xlu0 0
      %367 = vperm.xlu0 %366, %v361
      %v368 = vpop.permute.xlu0 %367
      %v370 = vsub.f32 %v355, %v368
      %v371 = vmul.f32 %v370, 1.442695
      %v372 = vpow.pop %v371
      %v373 = vld [vmem:[#allocation3] sm:$0xff]
      %v374 = vmul.f32 %v364, %v373
      %v375 = vsel %vm330, %v372, 0.0
      %376 = vadd.xlane.f32.xlu0 %v375
      %v377 = vpop.xlane.xlu0 %376
      %v378 = vadd.f32 %v374, %v377
      %vm379 = vcmask 7168
      %380 = vst.msk [vmem:[#allocation3] sm:$0xff] %vm379, %v378
      %v381 = vld [vmem:[#allocation4] sm:$0xff]
      %383 = vset.pattern.permute.xlu0 0
      %384 = vperm.xlu0 %383, %v364
      %v385 = vpop.permute.xlu0 %384
      %v387 = vmul.f32 %v385, %v381
      %v388 = vld [vmem:[%s307] sm:$0xff]
      %v390 = vsel %vm330, %v372, 0
      %392 = vmatpush.msra.mxu0 0.0
      %393 = vmatpush.msra.mxu0 0.0
      %394 = vmatpush.msra.mxu0 0.0
      %395 = vmatpush.msra.mxu0 0.0
      %396 = vmatpush.msra.mxu0 0.0
      %397 = vmatpush.msra.mxu0 0.0
      %398 = vmatpush.msra.mxu0 0.0
      %399 = vmatpush.msra.mxu0 0.0
      %400 = vmatpush.msra.mxu0 0.0
      %401 = vmatpush.msra.mxu0 0.0
      %402 = vmatpush.msra.mxu0 0.0
      %403 = vmatpush.msra.mxu0 0.0
      %404 = vmatpush.msra.mxu0 0.0
      %405 = vmatpush.msra.mxu0 0.0
      %406 = vmatpush.msra.mxu0 0.0
      %407 = vmatpush.msra.mxu0 %v388
      %408 = vmatmul.f32.gmra.mxu0 %v390
      %v409 = vpop.f32.mrf.mxu0
      %v410 = vadd.f32 0.0, %v409
      %411 = vdwg.mxu0
      %v412 = vadd.f32 %v387, %v410
      %413 = vst.msk [vmem:[#allocation4] sm:$0xff] %vm330, %v412
      %414 = vst.msk [vmem:[#allocation2] sm:$0xff] %vm379, %v361
      // Predicated region
      $region37: #{physics_informed_self_attention.4} parent=31 // pred_check
        %p415 = pneg %p319
      $region38: #{physics_informed_self_attention.4} parent=31 // pred_check_branch
        %417 = sbr.rel (%p415) target = $region40
      $region39: #{physics_informed_self_attention.4} parent=31 // pred_region
        %v418 = vld [vmem:[#allocation3] sm:$0xff]
        %v419 = vrcp.pop %v418
        %v420 = vmul.f32 %v418, %v419
        %v421 = vsub.f32 1.0, %v420
        %v422 = vmul.f32 %v419, %v421
        %v423 = vadd.f32 %v419, %v422
        %vm424 = vweird.f32 %v418
        %vm425 = vweird.f32 %v419
        %vm426 = vmor %vm424, %vm425
        %v427 = vsel %vm426, %v419, %v423
        %v428 = vand.u32 2147483647, %v418
        %vm429 = vcmp.eq.f32.partialorder %v428, 8.507059e+37
        %v430 = vand.u32 %v418, 2147483648
        %v431 = vor.u32 1.1754944e-38, %v430
        %v432 = vsel %vm429, %v431, %v427
        %v433 = vld [vmem:[#allocation4] sm:$0xff]
        %435 = vset.pattern.permute.xlu0 0
        %436 = vperm.xlu0 %435, %v432
        %v437 = vpop.permute.xlu0 %436
        %v439 = vmul.f32 %v433, %v437
        %440 = vst.msk [vmem:[%s318] sm:$0xff] %vm330, %v439
      $region40: #{physics_informed_self_attention.4} parent=31 // pred_fallthru
        _
      %p441 = scmp.lt.s32.totalorder %s20, 1
      %s442 = scalar_select %p441, %s20, 1
      %p443 = scmp.lt.s32.totalorder %s21, 3
      %s444 = scalar_select %p443, %s21, 3
      %p445 = scmp.lt.s32.totalorder %s22, 0
      %s446 = scalar_select %p445, %s22, 0
      %s447 = sadd.s32 %s446, %s444
      %s448 = smul.addr %s442, 4
      %s449 = sadd.s32 %s447, %s448
      %s450 = smul.addr %s449, 8
      %s451 = scalar_lea.vmem %s3, %s450
      // Predicated region
      $region41: #{physics_informed_self_attention.4} parent=31 // pred_check
        %p452 = pneg %p152
      $region42: #{physics_informed_self_attention.4} parent=31 // pred_check_branch
        %454 = sbr.rel (%p452) target = $region44
      $region43: #{physics_informed_self_attention.4} parent=31 // pred_region
        _
      $region44: #{physics_informed_self_attention.4} parent=31 // pred_fallthru
        _
    $region32: #{physics_informed_self_attention.4} parent=5 // pred_fallthru
      _
    %p455 = scmp.le.s32.totalorder 2, %s9
    // Predicated region
    $region45: #{physics_informed_self_attention.4} parent=5 // pred_check
      %p456 = pneg %p455
    $region46: #{physics_informed_self_attention.4} parent=5 // pred_check_branch
      %458 = sbr.rel (%p456) target = $region48
    $region47: #{physics_informed_self_attention.4} parent=5 // pred_region
      %s459 = ssub.s32 %s9, 2
      // Predicated region
      $region49: #{physics_informed_self_attention.4} parent=47 // pred_check
        %p460 = pneg %p158
      $region50: #{physics_informed_self_attention.4} parent=47 // pred_check_branch
        %462 = sbr.rel (%p460) target = $region52
      $region51: #{physics_informed_self_attention.4} parent=47 // pred_region
        %p463 = scmp.lt.s32.totalorder %s24, 1
        %s464 = scalar_select %p463, %s24, 1
        %p465 = scmp.lt.s32.totalorder %s25, 3
        %s466 = scalar_select %p465, %s25, 3
        %p467 = scmp.lt.s32.totalorder %s26, 0
        %s468 = scalar_select %p467, %s26, 0
        %s469 = sadd.s32 %s468, %s466
        %s470 = smul.addr %s464, 4
        %s471 = sadd.s32 %s469, %s470
        %s472 = smul.addr %s471, 8
        %s473 = scalar_lea.vmem %s3, %s472
      $region52: #{physics_informed_self_attention.4} parent=47 // pred_fallthru
        _
    $region48: #{physics_informed_self_attention.4} parent=5 // pred_fallthru
      _
  $region6: #{physics_informed_self_attention.4} parent=0 // loop_footer
    %s13 = sadd.s32 1, %s9
  $region7: #{physics_informed_self_attention.4} parent=0 // loop_footer_branch
    %8 = sbr.rel target = $region3
  $region8: #{physics_informed_self_attention.4} parent=0 // loop_exit
    _

</llo_original>
